<compile_context>
chip_gen: v6e
topology: v6e:2x2x1
jax: 0.10.0
libtpu: 0.0.40
codegen_flags: <defaults>
</compile_context>

<pallas_src>
import jax
import jax.numpy as jnp
from jax.experimental import pallas as pl
from jax.experimental.pallas import tpu as pltpu

# ----- config (mirrors config.num_sequence / config.* in the PyTorch module) -----
VOCAB = 14          # len(config.num_sequence): PAD/UNK/SOS/EOS + digits 0..9
PAD = 0             # config.num_sequence.PAD
EMBED_DIM = 32      # config.embedding_dim
HIDDEN = 32         # config.hidden_size
NUM_LAYERS = 1      # config.num_layers


def gru_kernel(tok_ref, gi_tbl_ref, whh_ref, bhhn_ref, lens_ref, out_ref, hid_ref):
    """Single-invocation GRU recurrence (no grid).

    tok_ref   : (T*B, 1) int32 token ids, TIME-MAJOR (row t*B + b = tokens[b, t])
    gi_tbl_ref: (VOCAB, 3H) precomputed input-side gate table
                = embedding @ W_ih^T + b_ih + [b_hh_r | b_hh_z | 0]
    whh_ref   : (H, 3H)  hidden->gates weight (W_hh^T), column order [r | z | n]
    bhhn_ref  : (1, H)   hidden bias of the n gate (must stay inside r * (...))
    lens_ref  : (B, 1)   int32 valid sequence lengths
    out_ref   : (B, T*H) lane-dense output, reshaped to (B, T, H) by the wrapper
    hid_ref   : (NUM_LAYERS, B, H) last valid hidden state per sequence
    """
    TB = tok_ref.shape[0]
    B = lens_ref.shape[0]
    T = TB // B
    H = whh_ref.shape[0]
    V = gi_tbl_ref.shape[0]

    # ---- fused embedding lookup + input projection (one MXU pass, off the chain) ----
    tok = tok_ref[...]                                                # (T*B, 1)
    vocab_ids = jax.lax.broadcasted_iota(jnp.int32, (TB, V), 1)
    onehot = (tok == vocab_ids).astype(jnp.float32)                   # (T*B, V)
    gi_flat = jnp.dot(onehot, gi_tbl_ref[...],
                      preferred_element_type=jnp.float32)             # (T*B, 3H)
    gi_all = gi_flat.reshape(T, B, 3 * H)                             # time-major

    whh = whh_ref[...]                                                # (H, 3H)
    bhh_n = bhhn_ref[...]                                             # (1, H)
    lens = lens_ref[...]                                              # (B, 1)

    h = jnp.zeros((B, H), jnp.float32)
    outs = []
    # T is small and static -> fully unrolled recurrence, no per-step grid overhead.
    for t in range(T):
        gi = gi_all[t]                                                # (B, 3H) first-axis read
        gh = jnp.dot(h, whh, preferred_element_type=jnp.float32)      # (B, 3H)
        # merged r|z sigmoid: one EUP push over 2H lanes instead of two
        rz = jax.nn.sigmoid(gi[:, :2 * H] + gh[:, :2 * H])
        r = rz[:, :H]
        z = rz[:, H:]
        n = jnp.tanh(gi[:, 2 * H:] + r * (gh[:, 2 * H:] + bhh_n))
        h_new = n + z * (h - n)                                       # == (1-z)*n + z*h

        mask = lens > t                                               # (B, 1)
        h = jnp.where(mask, h_new, h)
        # padded output positions get padding_value == PAD (== 0.0 here)
        outs.append(jnp.where(mask, h_new, jnp.float32(PAD)))

    # one lane-dense 256-wide store instead of 8 lane-offset masked stores
    out_ref[...] = jnp.concatenate(outs, axis=1)                      # (B, T*H)
    # hidden = last *valid* hidden state per sequence
    hid_ref[0] = h


@jax.jit
def encoder_forward(tokens, input_len, params):
    """tokens: [B, T] int32, input_len: [B] int32 (sorted desc, max == T).

    Returns (out [B, T, H] float32, hidden [NUM_LAYERS, B, H] float32),
    matching nn.GRU(batch_first=True) on a packed sequence.
    Note: pad_packed_sequence yields T_out = max(input_len); we require
    max(input_len) == T so shapes match.
    """
    B, T = tokens.shape
    H = HIDDEN

    # Layout plumbing only (no gather, no big intermediates): time-major token column.
    tok_col = tokens.T.reshape(T * B, 1).astype(jnp.int32)            # (T*B, 1)
    lens2d = input_len.reshape(B, 1).astype(jnp.int32)                # (B, 1)

    out_flat, hidden = pl.pallas_call(
        gru_kernel,
        out_shape=(
            jax.ShapeDtypeStruct((B, T * H), jnp.float32),
            jax.ShapeDtypeStruct((NUM_LAYERS, B, H), jnp.float32),
        ),
        in_specs=[
            pl.BlockSpec(memory_space=pltpu.MemorySpace.VMEM),        # token ids
            pl.BlockSpec(memory_space=pltpu.MemorySpace.VMEM),        # gi_table
            pl.BlockSpec(memory_space=pltpu.MemorySpace.VMEM),        # W_hh^T
            pl.BlockSpec(memory_space=pltpu.MemorySpace.VMEM),        # b_hh (n gate)
            pl.BlockSpec(memory_space=pltpu.MemorySpace.VMEM),        # lengths
        ],
        out_specs=(
            pl.BlockSpec(memory_space=pltpu.MemorySpace.VMEM),
            pl.BlockSpec(memory_space=pltpu.MemorySpace.VMEM),
        ),
    )(tok_col, params["gi_table"], params["w_hh_t"], params["b_hh_n"], lens2d)

    out = out_flat.reshape(B, T, H)    # row-major reshape: no data movement
    return out, hidden


def init_params(key):
    """Deterministic synthetic parameters with PyTorch GRU weight shapes."""
    k1, k2, k3, k4, k5 = jax.random.split(key, 5)
    scale = 1.0 / jnp.sqrt(HIDDEN)
    emb = jax.random.normal(k1, (VOCAB, EMBED_DIM), jnp.float32) * 0.1
    emb = emb.at[PAD].set(0.0)                            # padding_idx row is zero
    w_ih = jax.random.uniform(k2, (3 * HIDDEN, EMBED_DIM), jnp.float32, -scale, scale)
    w_hh = jax.random.uniform(k3, (3 * HIDDEN, HIDDEN), jnp.float32, -scale, scale)
    b_ih = jax.random.uniform(k4, (3 * HIDDEN,), jnp.float32, -scale, scale)
    b_hh = jax.random.uniform(k5, (3 * HIDDEN,), jnp.float32, -scale, scale)

    # Hoisted input projection: gi_table[v] = emb[v] @ W_ih^T + b_ih, plus the
    # r/z parts of b_hh (they commute out of sigmoid(gi + gh)).  The n-gate part
    # of b_hh must stay inside the r * (.) term, so it is passed separately.
    b_hh_rz = jnp.concatenate(
        [b_hh[:2 * HIDDEN], jnp.zeros((HIDDEN,), jnp.float32)])
    gi_table = emb @ w_ih.T + b_ih + b_hh_rz              # (VOCAB, 3H)

    return {
        "gi_table": gi_table,
        "w_hh_t": w_hh.T,                                 # (H, 3H)
        "b_hh_n": b_hh[2 * HIDDEN:].reshape(1, HIDDEN),   # (1, H)
        # raw weights kept only for the pure-JAX reference
        "embedding": emb, "w_ih": w_ih, "w_hh": w_hh,
        "b_ih_flat": b_ih, "b_hh_flat": b_hh,
    }


def reference_forward(tokens, input_len, params):
    """Pure-JAX reference with packed-sequence semantics (for validation)."""
    emb = params["embedding"][tokens]                     # [B, T, E]
    B, T, _ = emb.shape
    H = HIDDEN
    W_ih, W_hh = params["w_ih"], params["w_hh"]
    b_ih, b_hh = params["b_ih_flat"], params["b_hh_flat"]
    h = jnp.zeros((B, H), jnp.float32)
    outs = []
    for t in range(T):
        xt = emb[:, t]
        gi = xt @ W_ih.T + b_ih
        gh = h @ W_hh.T + b_hh
        r = jax.nn.sigmoid(gi[:, :H] + gh[:, :H])
        z = jax.nn.sigmoid(gi[:, H:2 * H] + gh[:, H:2 * H])
        n = jnp.tanh(gi[:, 2 * H:] + r * gh[:, 2 * H:])
        h_new = (1.0 - z) * n + z * h
        mask = (input_len > t)[:, None]
        h = jnp.where(mask, h_new, h)
        outs.append(jnp.where(mask, h_new, float(PAD)))
    out = jnp.stack(outs, axis=1)
    return out, h[None]


if __name__ == "__main__":
    key = jax.random.PRNGKey(0)
    pkey, tkey = jax.random.split(key)
    params = init_params(pkey)

    B, T = 2, 8
    # lengths sorted descending (pack_padded_sequence default), max == T
    input_len = jnp.array([8, 5], dtype=jnp.int32)
    tokens = jax.random.randint(tkey, (B, T), 1, VOCAB, dtype=jnp.int32)
    # positions past the sequence length hold the PAD token
    pos = jnp.arange(T)[None, :]
    tokens = jnp.where(pos < input_len[:, None], tokens, PAD)

    out, hidden = encoder_forward(tokens, input_len, params)
    jax.block_until_ready((out, hidden))

    out_ref, hidden_ref = reference_forward(tokens, input_len, params)
    assert out.shape == (B, T, HIDDEN) and hidden.shape == (NUM_LAYERS, B, HIDDEN)
    assert jnp.allclose(out, out_ref, atol=1e-4, rtol=1e-4)
    assert jnp.allclose(hidden, hidden_ref, atol=1e-4, rtol=1e-4)

    print("KERNEL_OK")
</pallas_src>

<mosaic_0001>
module attributes {stable_mosaic.version = 11 : i64} {
  func.func @gru_kernel(%arg0: memref<16x1xi32, #tpu.memory_space<vmem>>, %arg1: memref<14x96xf32, #tpu.memory_space<vmem>>, %arg2: memref<32x96xf32, #tpu.memory_space<vmem>>, %arg3: memref<1x32xf32, #tpu.memory_space<vmem>>, %arg4: memref<2x1xi32, #tpu.memory_space<vmem>>, %arg5: memref<2x256xf32, #tpu.memory_space<vmem>>, %arg6: memref<1x2x32xf32, #tpu.memory_space<vmem>>) attributes {dimension_semantics = [], scalar_prefetch = 0 : i64, scratch_operands = 0 : i64, tpu.core_type = #tpu.core_type<tc>} {
    %c0 = arith.constant 0 : index
    %c0_0 = arith.constant 0 : index
    %0 = vector.load %arg0[%c0, %c0_0] : memref<16x1xi32, #tpu.memory_space<vmem>>, vector<16x1xi32>
    %1 = tpu.iota {dimensions = array<i32: 1>} : vector<16x14xi32>
    %2 = vector.broadcast %0 : vector<16x1xi32> to vector<16x14xi32>
    %3 = arith.cmpi eq, %2, %1 : vector<16x14xi32>
    %4 = arith.extui %3 : vector<16x14xi1> to vector<16x14xi32>
    %5 = arith.sitofp %4 : vector<16x14xi32> to vector<16x14xf32>
    %c0_1 = arith.constant 0 : index
    %c0_2 = arith.constant 0 : index
    %6 = vector.load %arg1[%c0_1, %c0_2] : memref<14x96xf32, #tpu.memory_space<vmem>>, vector<14x96xf32>
    %cst = arith.constant dense<0.000000e+00> : vector<16x96xf32>
    %7 = tpu.matmul %5, %6, %cst {dimension_numbers = #tpu.dot_dimension_numbers<[1], [0], [0], [1], [0, 0, 1, 1], [], []>} : vector<16x14xf32>, vector<14x96xf32>, vector<16x96xf32> -> vector<16x96xf32>
    %8 = vector.shape_cast %7 : vector<16x96xf32> to vector<8x2x96xf32>
    %c0_3 = arith.constant 0 : index
    %c0_4 = arith.constant 0 : index
    %9 = vector.load %arg2[%c0_3, %c0_4] : memref<32x96xf32, #tpu.memory_space<vmem>>, vector<32x96xf32>
    %c0_5 = arith.constant 0 : index
    %c0_6 = arith.constant 0 : index
    %10 = vector.load %arg3[%c0_5, %c0_6] : memref<1x32xf32, #tpu.memory_space<vmem>>, vector<1x32xf32>
    %c0_7 = arith.constant 0 : index
    %c0_8 = arith.constant 0 : index
    %11 = vector.load %arg4[%c0_7, %c0_8] : memref<2x1xi32, #tpu.memory_space<vmem>>, vector<2x1xi32>
    %cst_9 = arith.constant 0.000000e+00 : f32
    %12 = vector.broadcast %cst_9 : f32 to vector<2x32xf32>
    %13 = vector.extract_strided_slice %8 {offsets = [0, 0, 0], sizes = [1, 2, 96], strides = [1, 1, 1]} : vector<8x2x96xf32> to vector<1x2x96xf32>
    %14 = vector.shape_cast %13 : vector<1x2x96xf32> to vector<2x96xf32>
    %cst_10 = arith.constant dense<0.000000e+00> : vector<2x96xf32>
    %15 = tpu.matmul %12, %9, %cst_10 {dimension_numbers = #tpu.dot_dimension_numbers<[1], [0], [0], [1], [0, 0, 1, 1], [], []>} : vector<2x32xf32>, vector<32x96xf32>, vector<2x96xf32> -> vector<2x96xf32>
    %16 = vector.extract_strided_slice %14 {offsets = [0, 0], sizes = [2, 64], strides = [1, 1]} : vector<2x96xf32> to vector<2x64xf32>
    %17 = vector.extract_strided_slice %15 {offsets = [0, 0], sizes = [2, 64], strides = [1, 1]} : vector<2x96xf32> to vector<2x64xf32>
    %18 = arith.addf %16, %17 : vector<2x64xf32>
    %19 = arith.negf %18 : vector<2x64xf32>
    %20 = math.exp %19 : vector<2x64xf32>
    %cst_11 = arith.constant 1.000000e+00 : f32
    %21 = vector.broadcast %cst_11 : f32 to vector<2x64xf32>
    %22 = arith.addf %21, %20 : vector<2x64xf32>
    %23 = arith.divf %21, %22 : vector<2x64xf32>
    %24 = vector.extract_strided_slice %23 {offsets = [0, 0], sizes = [2, 32], strides = [1, 1]} : vector<2x64xf32> to vector<2x32xf32>
    %25 = vector.extract_strided_slice %23 {offsets = [0, 32], sizes = [2, 32], strides = [1, 1]} : vector<2x64xf32> to vector<2x32xf32>
    %26 = vector.extract_strided_slice %14 {offsets = [0, 64], sizes = [2, 32], strides = [1, 1]} : vector<2x96xf32> to vector<2x32xf32>
    %27 = vector.extract_strided_slice %15 {offsets = [0, 64], sizes = [2, 32], strides = [1, 1]} : vector<2x96xf32> to vector<2x32xf32>
    %28 = vector.broadcast %10 : vector<1x32xf32> to vector<2x32xf32>
    %29 = arith.addf %27, %28 : vector<2x32xf32>
    %30 = arith.mulf %24, %29 : vector<2x32xf32>
    %31 = arith.addf %26, %30 : vector<2x32xf32>
    %32 = math.tanh %31 : vector<2x32xf32>
    %33 = arith.subf %12, %32 : vector<2x32xf32>
    %34 = arith.mulf %25, %33 : vector<2x32xf32>
    %35 = arith.addf %32, %34 : vector<2x32xf32>
    %c0_i32 = arith.constant 0 : i32
    %36 = vector.broadcast %c0_i32 : i32 to vector<2x1xi32>
    %37 = arith.cmpi sgt, %11, %36 : vector<2x1xi32>
    %38 = vector.shape_cast %37 : vector<2x1xi1> to vector<2x1xi1>
    %39 = vector.broadcast %38 : vector<2x1xi1> to vector<2x32xi1>
    %40 = arith.select %39, %35, %12 : vector<2x32xi1>, vector<2x32xf32>
    %cst_12 = arith.constant 0.000000e+00 : f32
    %41 = vector.shape_cast %37 : vector<2x1xi1> to vector<2x1xi1>
    %42 = vector.broadcast %41 : vector<2x1xi1> to vector<2x32xi1>
    %43 = vector.broadcast %cst_12 : f32 to vector<2x32xf32>
    %44 = arith.select %42, %35, %43 : vector<2x32xi1>, vector<2x32xf32>
    %45 = vector.extract_strided_slice %8 {offsets = [1, 0, 0], sizes = [1, 2, 96], strides = [1, 1, 1]} : vector<8x2x96xf32> to vector<1x2x96xf32>
    %46 = vector.shape_cast %45 : vector<1x2x96xf32> to vector<2x96xf32>
    %cst_13 = arith.constant dense<0.000000e+00> : vector<2x96xf32>
    %47 = tpu.matmul %40, %9, %cst_13 {dimension_numbers = #tpu.dot_dimension_numbers<[1], [0], [0], [1], [0, 0, 1, 1], [], []>} : vector<2x32xf32>, vector<32x96xf32>, vector<2x96xf32> -> vector<2x96xf32>
    %48 = vector.extract_strided_slice %46 {offsets = [0, 0], sizes = [2, 64], strides = [1, 1]} : vector<2x96xf32> to vector<2x64xf32>
    %49 = vector.extract_strided_slice %47 {offsets = [0, 0], sizes = [2, 64], strides = [1, 1]} : vector<2x96xf32> to vector<2x64xf32>
    %50 = arith.addf %48, %49 : vector<2x64xf32>
    %51 = arith.negf %50 : vector<2x64xf32>
    %52 = math.exp %51 : vector<2x64xf32>
    %cst_14 = arith.constant 1.000000e+00 : f32
    %53 = vector.broadcast %cst_14 : f32 to vector<2x64xf32>
    %54 = arith.addf %53, %52 : vector<2x64xf32>
    %55 = arith.divf %53, %54 : vector<2x64xf32>
    %56 = vector.extract_strided_slice %55 {offsets = [0, 0], sizes = [2, 32], strides = [1, 1]} : vector<2x64xf32> to vector<2x32xf32>
    %57 = vector.extract_strided_slice %55 {offsets = [0, 32], sizes = [2, 32], strides = [1, 1]} : vector<2x64xf32> to vector<2x32xf32>
    %58 = vector.extract_strided_slice %46 {offsets = [0, 64], sizes = [2, 32], strides = [1, 1]} : vector<2x96xf32> to vector<2x32xf32>
    %59 = vector.extract_strided_slice %47 {offsets = [0, 64], sizes = [2, 32], strides = [1, 1]} : vector<2x96xf32> to vector<2x32xf32>
    %60 = vector.broadcast %10 : vector<1x32xf32> to vector<2x32xf32>
    %61 = arith.addf %59, %60 : vector<2x32xf32>
    %62 = arith.mulf %56, %61 : vector<2x32xf32>
    %63 = arith.addf %58, %62 : vector<2x32xf32>
    %64 = math.tanh %63 : vector<2x32xf32>
    %65 = arith.subf %40, %64 : vector<2x32xf32>
    %66 = arith.mulf %57, %65 : vector<2x32xf32>
    %67 = arith.addf %64, %66 : vector<2x32xf32>
    %c1_i32 = arith.constant 1 : i32
    %68 = vector.broadcast %c1_i32 : i32 to vector<2x1xi32>
    %69 = arith.cmpi sgt, %11, %68 : vector<2x1xi32>
    %70 = vector.shape_cast %69 : vector<2x1xi1> to vector<2x1xi1>
    %71 = vector.broadcast %70 : vector<2x1xi1> to vector<2x32xi1>
    %72 = arith.select %71, %67, %40 : vector<2x32xi1>, vector<2x32xf32>
    %cst_15 = arith.constant 0.000000e+00 : f32
    %73 = vector.shape_cast %69 : vector<2x1xi1> to vector<2x1xi1>
    %74 = vector.broadcast %73 : vector<2x1xi1> to vector<2x32xi1>
    %75 = vector.broadcast %cst_15 : f32 to vector<2x32xf32>
    %76 = arith.select %74, %67, %75 : vector<2x32xi1>, vector<2x32xf32>
    %77 = vector.extract_strided_slice %8 {offsets = [2, 0, 0], sizes = [1, 2, 96], strides = [1, 1, 1]} : vector<8x2x96xf32> to vector<1x2x96xf32>
    %78 = vector.shape_cast %77 : vector<1x2x96xf32> to vector<2x96xf32>
    %cst_16 = arith.constant dense<0.000000e+00> : vector<2x96xf32>
    %79 = tpu.matmul %72, %9, %cst_16 {dimension_numbers = #tpu.dot_dimension_numbers<[1], [0], [0], [1], [0, 0, 1, 1], [], []>} : vector<2x32xf32>, vector<32x96xf32>, vector<2x96xf32> -> vector<2x96xf32>
    %80 = vector.extract_strided_slice %78 {offsets = [0, 0], sizes = [2, 64], strides = [1, 1]} : vector<2x96xf32> to vector<2x64xf32>
    %81 = vector.extract_strided_slice %79 {offsets = [0, 0], sizes = [2, 64], strides = [1, 1]} : vector<2x96xf32> to vector<2x64xf32>
    %82 = arith.addf %80, %81 : vector<2x64xf32>
    %83 = arith.negf %82 : vector<2x64xf32>
    %84 = math.exp %83 : vector<2x64xf32>
    %cst_17 = arith.constant 1.000000e+00 : f32
    %85 = vector.broadcast %cst_17 : f32 to vector<2x64xf32>
    %86 = arith.addf %85, %84 : vector<2x64xf32>
    %87 = arith.divf %85, %86 : vector<2x64xf32>
    %88 = vector.extract_strided_slice %87 {offsets = [0, 0], sizes = [2, 32], strides = [1, 1]} : vector<2x64xf32> to vector<2x32xf32>
    %89 = vector.extract_strided_slice %87 {offsets = [0, 32], sizes = [2, 32], strides = [1, 1]} : vector<2x64xf32> to vector<2x32xf32>
    %90 = vector.extract_strided_slice %78 {offsets = [0, 64], sizes = [2, 32], strides = [1, 1]} : vector<2x96xf32> to vector<2x32xf32>
    %91 = vector.extract_strided_slice %79 {offsets = [0, 64], sizes = [2, 32], strides = [1, 1]} : vector<2x96xf32> to vector<2x32xf32>
    %92 = vector.broadcast %10 : vector<1x32xf32> to vector<2x32xf32>
    %93 = arith.addf %91, %92 : vector<2x32xf32>
    %94 = arith.mulf %88, %93 : vector<2x32xf32>
    %95 = arith.addf %90, %94 : vector<2x32xf32>
    %96 = math.tanh %95 : vector<2x32xf32>
    %97 = arith.subf %72, %96 : vector<2x32xf32>
    %98 = arith.mulf %89, %97 : vector<2x32xf32>
    %99 = arith.addf %96, %98 : vector<2x32xf32>
    %c2_i32 = arith.constant 2 : i32
    %100 = vector.broadcast %c2_i32 : i32 to vector<2x1xi32>
    %101 = arith.cmpi sgt, %11, %100 : vector<2x1xi32>
    %102 = vector.shape_cast %101 : vector<2x1xi1> to vector<2x1xi1>
    %103 = vector.broadcast %102 : vector<2x1xi1> to vector<2x32xi1>
    %104 = arith.select %103, %99, %72 : vector<2x32xi1>, vector<2x32xf32>
    %cst_18 = arith.constant 0.000000e+00 : f32
    %105 = vector.shape_cast %101 : vector<2x1xi1> to vector<2x1xi1>
    %106 = vector.broadcast %105 : vector<2x1xi1> to vector<2x32xi1>
    %107 = vector.broadcast %cst_18 : f32 to vector<2x32xf32>
    %108 = arith.select %106, %99, %107 : vector<2x32xi1>, vector<2x32xf32>
    %109 = vector.extract_strided_slice %8 {offsets = [3, 0, 0], sizes = [1, 2, 96], strides = [1, 1, 1]} : vector<8x2x96xf32> to vector<1x2x96xf32>
    %110 = vector.shape_cast %109 : vector<1x2x96xf32> to vector<2x96xf32>
    %cst_19 = arith.constant dense<0.000000e+00> : vector<2x96xf32>
    %111 = tpu.matmul %104, %9, %cst_19 {dimension_numbers = #tpu.dot_dimension_numbers<[1], [0], [0], [1], [0, 0, 1, 1], [], []>} : vector<2x32xf32>, vector<32x96xf32>, vector<2x96xf32> -> vector<2x96xf32>
    %112 = vector.extract_strided_slice %110 {offsets = [0, 0], sizes = [2, 64], strides = [1, 1]} : vector<2x96xf32> to vector<2x64xf32>
    %113 = vector.extract_strided_slice %111 {offsets = [0, 0], sizes = [2, 64], strides = [1, 1]} : vector<2x96xf32> to vector<2x64xf32>
    %114 = arith.addf %112, %113 : vector<2x64xf32>
    %115 = arith.negf %114 : vector<2x64xf32>
    %116 = math.exp %115 : vector<2x64xf32>
    %cst_20 = arith.constant 1.000000e+00 : f32
    %117 = vector.broadcast %cst_20 : f32 to vector<2x64xf32>
    %118 = arith.addf %117, %116 : vector<2x64xf32>
    %119 = arith.divf %117, %118 : vector<2x64xf32>
    %120 = vector.extract_strided_slice %119 {offsets = [0, 0], sizes = [2, 32], strides = [1, 1]} : vector<2x64xf32> to vector<2x32xf32>
    %121 = vector.extract_strided_slice %119 {offsets = [0, 32], sizes = [2, 32], strides = [1, 1]} : vector<2x64xf32> to vector<2x32xf32>
    %122 = vector.extract_strided_slice %110 {offsets = [0, 64], sizes = [2, 32], strides = [1, 1]} : vector<2x96xf32> to vector<2x32xf32>
    %123 = vector.extract_strided_slice %111 {offsets = [0, 64], sizes = [2, 32], strides = [1, 1]} : vector<2x96xf32> to vector<2x32xf32>
    %124 = vector.broadcast %10 : vector<1x32xf32> to vector<2x32xf32>
    %125 = arith.addf %123, %124 : vector<2x32xf32>
    %126 = arith.mulf %120, %125 : vector<2x32xf32>
    %127 = arith.addf %122, %126 : vector<2x32xf32>
    %128 = math.tanh %127 : vector<2x32xf32>
    %129 = arith.subf %104, %128 : vector<2x32xf32>
    %130 = arith.mulf %121, %129 : vector<2x32xf32>
    %131 = arith.addf %128, %130 : vector<2x32xf32>
    %c3_i32 = arith.constant 3 : i32
    %132 = vector.broadcast %c3_i32 : i32 to vector<2x1xi32>
    %133 = arith.cmpi sgt, %11, %132 : vector<2x1xi32>
    %134 = vector.shape_cast %133 : vector<2x1xi1> to vector<2x1xi1>
    %135 = vector.broadcast %134 : vector<2x1xi1> to vector<2x32xi1>
    %136 = arith.select %135, %131, %104 : vector<2x32xi1>, vector<2x32xf32>
    %cst_21 = arith.constant 0.000000e+00 : f32
    %137 = vector.shape_cast %133 : vector<2x1xi1> to vector<2x1xi1>
    %138 = vector.broadcast %137 : vector<2x1xi1> to vector<2x32xi1>
    %139 = vector.broadcast %cst_21 : f32 to vector<2x32xf32>
    %140 = arith.select %138, %131, %139 : vector<2x32xi1>, vector<2x32xf32>
    %141 = vector.extract_strided_slice %8 {offsets = [4, 0, 0], sizes = [1, 2, 96], strides = [1, 1, 1]} : vector<8x2x96xf32> to vector<1x2x96xf32>
    %142 = vector.shape_cast %141 : vector<1x2x96xf32> to vector<2x96xf32>
    %cst_22 = arith.constant dense<0.000000e+00> : vector<2x96xf32>
    %143 = tpu.matmul %136, %9, %cst_22 {dimension_numbers = #tpu.dot_dimension_numbers<[1], [0], [0], [1], [0, 0, 1, 1], [], []>} : vector<2x32xf32>, vector<32x96xf32>, vector<2x96xf32> -> vector<2x96xf32>
    %144 = vector.extract_strided_slice %142 {offsets = [0, 0], sizes = [2, 64], strides = [1, 1]} : vector<2x96xf32> to vector<2x64xf32>
    %145 = vector.extract_strided_slice %143 {offsets = [0, 0], sizes = [2, 64], strides = [1, 1]} : vector<2x96xf32> to vector<2x64xf32>
    %146 = arith.addf %144, %145 : vector<2x64xf32>
    %147 = arith.negf %146 : vector<2x64xf32>
    %148 = math.exp %147 : vector<2x64xf32>
    %cst_23 = arith.constant 1.000000e+00 : f32
    %149 = vector.broadcast %cst_23 : f32 to vector<2x64xf32>
    %150 = arith.addf %149, %148 : vector<2x64xf32>
    %151 = arith.divf %149, %150 : vector<2x64xf32>
    %152 = vector.extract_strided_slice %151 {offsets = [0, 0], sizes = [2, 32], strides = [1, 1]} : vector<2x64xf32> to vector<2x32xf32>
    %153 = vector.extract_strided_slice %151 {offsets = [0, 32], sizes = [2, 32], strides = [1, 1]} : vector<2x64xf32> to vector<2x32xf32>
    %154 = vector.extract_strided_slice %142 {offsets = [0, 64], sizes = [2, 32], strides = [1, 1]} : vector<2x96xf32> to vector<2x32xf32>
    %155 = vector.extract_strided_slice %143 {offsets = [0, 64], sizes = [2, 32], strides = [1, 1]} : vector<2x96xf32> to vector<2x32xf32>
    %156 = vector.broadcast %10 : vector<1x32xf32> to vector<2x32xf32>
    %157 = arith.addf %155, %156 : vector<2x32xf32>
    %158 = arith.mulf %152, %157 : vector<2x32xf32>
    %159 = arith.addf %154, %158 : vector<2x32xf32>
    %160 = math.tanh %159 : vector<2x32xf32>
    %161 = arith.subf %136, %160 : vector<2x32xf32>
    %162 = arith.mulf %153, %161 : vector<2x32xf32>
    %163 = arith.addf %160, %162 : vector<2x32xf32>
    %c4_i32 = arith.constant 4 : i32
    %164 = vector.broadcast %c4_i32 : i32 to vector<2x1xi32>
    %165 = arith.cmpi sgt, %11, %164 : vector<2x1xi32>
    %166 = vector.shape_cast %165 : vector<2x1xi1> to vector<2x1xi1>
    %167 = vector.broadcast %166 : vector<2x1xi1> to vector<2x32xi1>
    %168 = arith.select %167, %163, %136 : vector<2x32xi1>, vector<2x32xf32>
    %cst_24 = arith.constant 0.000000e+00 : f32
    %169 = vector.shape_cast %165 : vector<2x1xi1> to vector<2x1xi1>
    %170 = vector.broadcast %169 : vector<2x1xi1> to vector<2x32xi1>
    %171 = vector.broadcast %cst_24 : f32 to vector<2x32xf32>
    %172 = arith.select %170, %163, %171 : vector<2x32xi1>, vector<2x32xf32>
    %173 = vector.extract_strided_slice %8 {offsets = [5, 0, 0], sizes = [1, 2, 96], strides = [1, 1, 1]} : vector<8x2x96xf32> to vector<1x2x96xf32>
    %174 = vector.shape_cast %173 : vector<1x2x96xf32> to vector<2x96xf32>
    %cst_25 = arith.constant dense<0.000000e+00> : vector<2x96xf32>
    %175 = tpu.matmul %168, %9, %cst_25 {dimension_numbers = #tpu.dot_dimension_numbers<[1], [0], [0], [1], [0, 0, 1, 1], [], []>} : vector<2x32xf32>, vector<32x96xf32>, vector<2x96xf32> -> vector<2x96xf32>
    %176 = vector.extract_strided_slice %174 {offsets = [0, 0], sizes = [2, 64], strides = [1, 1]} : vector<2x96xf32> to vector<2x64xf32>
    %177 = vector.extract_strided_slice %175 {offsets = [0, 0], sizes = [2, 64], strides = [1, 1]} : vector<2x96xf32> to vector<2x64xf32>
    %178 = arith.addf %176, %177 : vector<2x64xf32>
    %179 = arith.negf %178 : vector<2x64xf32>
    %180 = math.exp %179 : vector<2x64xf32>
    %cst_26 = arith.constant 1.000000e+00 : f32
    %181 = vector.broadcast %cst_26 : f32 to vector<2x64xf32>
    %182 = arith.addf %181, %180 : vector<2x64xf32>
    %183 = arith.divf %181, %182 : vector<2x64xf32>
    %184 = vector.extract_strided_slice %183 {offsets = [0, 0], sizes = [2, 32], strides = [1, 1]} : vector<2x64xf32> to vector<2x32xf32>
    %185 = vector.extract_strided_slice %183 {offsets = [0, 32], sizes = [2, 32], strides = [1, 1]} : vector<2x64xf32> to vector<2x32xf32>
    %186 = vector.extract_strided_slice %174 {offsets = [0, 64], sizes = [2, 32], strides = [1, 1]} : vector<2x96xf32> to vector<2x32xf32>
    %187 = vector.extract_strided_slice %175 {offsets = [0, 64], sizes = [2, 32], strides = [1, 1]} : vector<2x96xf32> to vector<2x32xf32>
    %188 = vector.broadcast %10 : vector<1x32xf32> to vector<2x32xf32>
    %189 = arith.addf %187, %188 : vector<2x32xf32>
    %190 = arith.mulf %184, %189 : vector<2x32xf32>
    %191 = arith.addf %186, %190 : vector<2x32xf32>
    %192 = math.tanh %191 : vector<2x32xf32>
    %193 = arith.subf %168, %192 : vector<2x32xf32>
    %194 = arith.mulf %185, %193 : vector<2x32xf32>
    %195 = arith.addf %192, %194 : vector<2x32xf32>
    %c5_i32 = arith.constant 5 : i32
    %196 = vector.broadcast %c5_i32 : i32 to vector<2x1xi32>
    %197 = arith.cmpi sgt, %11, %196 : vector<2x1xi32>
    %198 = vector.shape_cast %197 : vector<2x1xi1> to vector<2x1xi1>
    %199 = vector.broadcast %198 : vector<2x1xi1> to vector<2x32xi1>
    %200 = arith.select %199, %195, %168 : vector<2x32xi1>, vector<2x32xf32>
    %cst_27 = arith.constant 0.000000e+00 : f32
    %201 = vector.shape_cast %197 : vector<2x1xi1> to vector<2x1xi1>
    %202 = vector.broadcast %201 : vector<2x1xi1> to vector<2x32xi1>
    %203 = vector.broadcast %cst_27 : f32 to vector<2x32xf32>
    %204 = arith.select %202, %195, %203 : vector<2x32xi1>, vector<2x32xf32>
    %205 = vector.extract_strided_slice %8 {offsets = [6, 0, 0], sizes = [1, 2, 96], strides = [1, 1, 1]} : vector<8x2x96xf32> to vector<1x2x96xf32>
    %206 = vector.shape_cast %205 : vector<1x2x96xf32> to vector<2x96xf32>
    %cst_28 = arith.constant dense<0.000000e+00> : vector<2x96xf32>
    %207 = tpu.matmul %200, %9, %cst_28 {dimension_numbers = #tpu.dot_dimension_numbers<[1], [0], [0], [1], [0, 0, 1, 1], [], []>} : vector<2x32xf32>, vector<32x96xf32>, vector<2x96xf32> -> vector<2x96xf32>
    %208 = vector.extract_strided_slice %206 {offsets = [0, 0], sizes = [2, 64], strides = [1, 1]} : vector<2x96xf32> to vector<2x64xf32>
    %209 = vector.extract_strided_slice %207 {offsets = [0, 0], sizes = [2, 64], strides = [1, 1]} : vector<2x96xf32> to vector<2x64xf32>
    %210 = arith.addf %208, %209 : vector<2x64xf32>
    %211 = arith.negf %210 : vector<2x64xf32>
    %212 = math.exp %211 : vector<2x64xf32>
    %cst_29 = arith.constant 1.000000e+00 : f32
    %213 = vector.broadcast %cst_29 : f32 to vector<2x64xf32>
    %214 = arith.addf %213, %212 : vector<2x64xf32>
    %215 = arith.divf %213, %214 : vector<2x64xf32>
    %216 = vector.extract_strided_slice %215 {offsets = [0, 0], sizes = [2, 32], strides = [1, 1]} : vector<2x64xf32> to vector<2x32xf32>
    %217 = vector.extract_strided_slice %215 {offsets = [0, 32], sizes = [2, 32], strides = [1, 1]} : vector<2x64xf32> to vector<2x32xf32>
    %218 = vector.extract_strided_slice %206 {offsets = [0, 64], sizes = [2, 32], strides = [1, 1]} : vector<2x96xf32> to vector<2x32xf32>
    %219 = vector.extract_strided_slice %207 {offsets = [0, 64], sizes = [2, 32], strides = [1, 1]} : vector<2x96xf32> to vector<2x32xf32>
    %220 = vector.broadcast %10 : vector<1x32xf32> to vector<2x32xf32>
    %221 = arith.addf %219, %220 : vector<2x32xf32>
    %222 = arith.mulf %216, %221 : vector<2x32xf32>
    %223 = arith.addf %218, %222 : vector<2x32xf32>
    %224 = math.tanh %223 : vector<2x32xf32>
    %225 = arith.subf %200, %224 : vector<2x32xf32>
    %226 = arith.mulf %217, %225 : vector<2x32xf32>
    %227 = arith.addf %224, %226 : vector<2x32xf32>
    %c6_i32 = arith.constant 6 : i32
    %228 = vector.broadcast %c6_i32 : i32 to vector<2x1xi32>
    %229 = arith.cmpi sgt, %11, %228 : vector<2x1xi32>
    %230 = vector.shape_cast %229 : vector<2x1xi1> to vector<2x1xi1>
    %231 = vector.broadcast %230 : vector<2x1xi1> to vector<2x32xi1>
    %232 = arith.select %231, %227, %200 : vector<2x32xi1>, vector<2x32xf32>
    %cst_30 = arith.constant 0.000000e+00 : f32
    %233 = vector.shape_cast %229 : vector<2x1xi1> to vector<2x1xi1>
    %234 = vector.broadcast %233 : vector<2x1xi1> to vector<2x32xi1>
    %235 = vector.broadcast %cst_30 : f32 to vector<2x32xf32>
    %236 = arith.select %234, %227, %235 : vector<2x32xi1>, vector<2x32xf32>
    %237 = vector.extract_strided_slice %8 {offsets = [7, 0, 0], sizes = [1, 2, 96], strides = [1, 1, 1]} : vector<8x2x96xf32> to vector<1x2x96xf32>
    %238 = vector.shape_cast %237 : vector<1x2x96xf32> to vector<2x96xf32>
    %cst_31 = arith.constant dense<0.000000e+00> : vector<2x96xf32>
    %239 = tpu.matmul %232, %9, %cst_31 {dimension_numbers = #tpu.dot_dimension_numbers<[1], [0], [0], [1], [0, 0, 1, 1], [], []>} : vector<2x32xf32>, vector<32x96xf32>, vector<2x96xf32> -> vector<2x96xf32>
    %240 = vector.extract_strided_slice %238 {offsets = [0, 0], sizes = [2, 64], strides = [1, 1]} : vector<2x96xf32> to vector<2x64xf32>
    %241 = vector.extract_strided_slice %239 {offsets = [0, 0], sizes = [2, 64], strides = [1, 1]} : vector<2x96xf32> to vector<2x64xf32>
    %242 = arith.addf %240, %241 : vector<2x64xf32>
    %243 = arith.negf %242 : vector<2x64xf32>
    %244 = math.exp %243 : vector<2x64xf32>
    %cst_32 = arith.constant 1.000000e+00 : f32
    %245 = vector.broadcast %cst_32 : f32 to vector<2x64xf32>
    %246 = arith.addf %245, %244 : vector<2x64xf32>
    %247 = arith.divf %245, %246 : vector<2x64xf32>
    %248 = vector.extract_strided_slice %247 {offsets = [0, 0], sizes = [2, 32], strides = [1, 1]} : vector<2x64xf32> to vector<2x32xf32>
    %249 = vector.extract_strided_slice %247 {offsets = [0, 32], sizes = [2, 32], strides = [1, 1]} : vector<2x64xf32> to vector<2x32xf32>
    %250 = vector.extract_strided_slice %238 {offsets = [0, 64], sizes = [2, 32], strides = [1, 1]} : vector<2x96xf32> to vector<2x32xf32>
    %251 = vector.extract_strided_slice %239 {offsets = [0, 64], sizes = [2, 32], strides = [1, 1]} : vector<2x96xf32> to vector<2x32xf32>
    %252 = vector.broadcast %10 : vector<1x32xf32> to vector<2x32xf32>
    %253 = arith.addf %251, %252 : vector<2x32xf32>
    %254 = arith.mulf %248, %253 : vector<2x32xf32>
    %255 = arith.addf %250, %254 : vector<2x32xf32>
    %256 = math.tanh %255 : vector<2x32xf32>
    %257 = arith.subf %232, %256 : vector<2x32xf32>
    %258 = arith.mulf %249, %257 : vector<2x32xf32>
    %259 = arith.addf %256, %258 : vector<2x32xf32>
    %c7_i32 = arith.constant 7 : i32
    %260 = vector.broadcast %c7_i32 : i32 to vector<2x1xi32>
    %261 = arith.cmpi sgt, %11, %260 : vector<2x1xi32>
    %262 = vector.shape_cast %261 : vector<2x1xi1> to vector<2x1xi1>
    %263 = vector.broadcast %262 : vector<2x1xi1> to vector<2x32xi1>
    %264 = arith.select %263, %259, %232 : vector<2x32xi1>, vector<2x32xf32>
    %cst_33 = arith.constant 0.000000e+00 : f32
    %265 = vector.shape_cast %261 : vector<2x1xi1> to vector<2x1xi1>
    %266 = vector.broadcast %265 : vector<2x1xi1> to vector<2x32xi1>
    %267 = vector.broadcast %cst_33 : f32 to vector<2x32xf32>
    %268 = arith.select %266, %259, %267 : vector<2x32xi1>, vector<2x32xf32>
    %269 = tpu.concatenate %44, %76, %108, %140, %172, %204, %236, %268 in 1 : vector<2x32xf32>, vector<2x32xf32>, vector<2x32xf32>, vector<2x32xf32>, vector<2x32xf32>, vector<2x32xf32>, vector<2x32xf32>, vector<2x32xf32> -> vector<2x256xf32>
    %c0_34 = arith.constant 0 : index
    %c0_35 = arith.constant 0 : index
    %270 = vector.load %arg5[%c0_34, %c0_35] : memref<2x256xf32, #tpu.memory_space<vmem>>, vector<2x256xf32>
    tpu.vector_store %arg5[%c0_34, %c0_35], %269 {strides = array<i32>} : memref<2x256xf32, #tpu.memory_space<vmem>>, vector<2x256xf32>,
    %c0_36 = arith.constant 0 : index
    %c0_37 = arith.constant 0 : index
    %c0_38 = arith.constant 0 : index
    %271 = vector.load %arg6[%c0_36, %c0_37, %c0_38] : memref<1x2x32xf32, #tpu.memory_space<vmem>>, vector<1x2x32xf32>
    %272 = vector.shape_cast %271 : vector<1x2x32xf32> to vector<2x32xf32>
    %273 = vector.shape_cast %264 : vector<2x32xf32> to vector<1x2x32xf32>
    tpu.vector_store %arg6[%c0_36, %c0_37, %c0_38], %273 {strides = array<i32>} : memref<1x2x32xf32, #tpu.memory_space<vmem>>, vector<1x2x32xf32>,
    return
  }
}

</mosaic_0001>

<llo_original>
// kernel: encoder_forward.1
$region0: #{encoder_forward.1}
  #allocation0 [shape = 'u32[]', space=smem, size = 0x4, offset = 0x4, fixed_abs, tag = 'smem constant byte address 0x4 - core index']
  #allocation1 [shape = 'u32[144,128]{1,0:T(1,128)}', space=vmem, size = 0x12000, scoped, tag = 'internal scratch']
  %s0 = inlined_call_operand.vmem [shape: s32[16,1], index: 0, kind: input, shape index: {}]
  %s1 = inlined_call_operand.hbm [shape: f32[14,96], index: 1, kind: input, shape index: {}]
  %s2 = inlined_call_operand.vmem [shape: f32[32,96], index: 2, kind: input, shape index: {}]
  %s3 = inlined_call_operand.vmem [shape: f32[1,32], index: 3, kind: input, shape index: {}]
  %s4 = inlined_call_operand.vmem [shape: s32[2,1], index: 4, kind: input, shape index: {}]
  %s5 = inlined_call_operand.vmem [shape: f32[2,256], index: 5, kind: output, shape index: {0}]
  %s6 = inlined_call_operand.hbm [shape: f32[1,2,32], index: 6, kind: output, shape index: {1}]
  %7 = xla_tuple %s5, %s6
  %s8 = sld [smem:[#allocation0]]
  $region42: #{encoder_forward.1} parent=0
    _
  %s10 = ssub.s32 1, %s8
  %s11 = scalar_select 0, %s10, %s8
  $region1: #{encoder_forward.1} parent=0
    #allocation2 [shape = 'u8[8192]{0}', space=vmem, size = 0x2000, scoped, tag = 'input window, operand 1, single buffered']
    #allocation3 [shape = 's32[1]{0}', space=sflag, size = 0x4, scoped, tag = 'scoped memory for encoder_forward.1']
    #allocation4 [shape = 's32[1]{0}', space=sflag, size = 0x4, scoped, tag = 'scoped memory for encoder_forward.1']
    #allocation5 [shape = 'u8[1024]{0}', space=vmem, size = 0x400, scoped, tag = 'output window, operand 1, single buffered']
    %12 = vsyncpa [#allocation3], 0
    %13 = vsyncpa [#allocation4], 0
    // Predicated region
    $region2: #{encoder_forward.1} parent=1 // pred_check
      _
    $region3: #{encoder_forward.1} parent=1 // pred_check_branch
      %15 = sbr.rel (0) target = $region5
    $region4: #{encoder_forward.1} parent=1 // pred_region
      _
    $region5: #{encoder_forward.1} parent=1 // pred_fallthru
      _
    // Predicated region
    $region6: #{encoder_forward.1} parent=1 // pred_check
      _
    $region7: #{encoder_forward.1} parent=1 // pred_check_branch
      %17 = sbr.rel (0) target = $region9
    $region8: #{encoder_forward.1} parent=1 // pred_region
      %s19 = ssub.s32 256, 256
      %20 = vsyncadd [#allocation3], %s19
      %s21 = sshll.u32 [#allocation2], 4
      %s22 = int_to_ptr.vmem [resolvable:$true] %s21
      %27 = dma.hbm_to_vmem [thread:$0]  %s1, 256, %s22, [#allocation3], 128, 128, 8
    $region9: #{encoder_forward.1} parent=1 // pred_fallthru
      _
    // Predicated region
    $region10: #{encoder_forward.1} parent=1 // pred_check
      _
    $region11: #{encoder_forward.1} parent=1 // pred_check_branch
      %29 = sbr.rel (0) target = $region13
    $region12: #{encoder_forward.1} parent=1 // pred_region
      _
    $region13: #{encoder_forward.1} parent=1 // pred_fallthru
      _
    // Predicated region
    $region14: #{encoder_forward.1} parent=1 // pred_check
      _
    $region15: #{encoder_forward.1} parent=1 // pred_check_branch
      %31 = sbr.rel (0) target = $region17
    $region16: #{encoder_forward.1} parent=1 // pred_region
      _
    $region17: #{encoder_forward.1} parent=1 // pred_fallthru
      _
    // Predicated region
    $region18: #{encoder_forward.1} parent=1 // pred_check
      _
    $region19: #{encoder_forward.1} parent=1 // pred_check_branch
      %33 = sbr.rel (0) target = $region21
    $region20: #{encoder_forward.1} parent=1 // pred_region
      _
    $region21: #{encoder_forward.1} parent=1 // pred_fallthru
      _
    // Predicated region
    $region22: #{encoder_forward.1} parent=1 // pred_check
      _
    $region23: #{encoder_forward.1} parent=1 // pred_check_branch
      %35 = sbr.rel (0) target = $region25
    $region24: #{encoder_forward.1} parent=1 // pred_region
      %36 = dma.done [#allocation3], 256
    $region25: #{encoder_forward.1} parent=1 // pred_fallthru
      _
    %v37 = vld [vmem:[%s0] sm:$0xff]
    %v38 = vld [vmem:[%s0 + $0x8] sm:$0xff]
    %v39 = vlaneseq
    %v40 = vand.u32 %v39, 127
    %41 = vset.pattern.permute.xlu0 0
    %42 = vperm.xlu0 %41, %v37
    %v43 = vpop.permute.xlu0 %42
    %44 = vset.pattern.permute.xlu0 0
    %45 = vperm.xlu0 %44, %v38
    %v46 = vpop.permute.xlu0 %45
    %vm47 = vcmp.eq.s32.totalorder %v43, %v40
    %vm48 = vcmp.eq.s32.totalorder %v46, %v40
    %v49 = vsel %vm47, 1, 0
    %v50 = vsel %vm48, 1, 0
    %v51 = vcvt.s32.f32 %v49
    %v52 = vcvt.s32.f32 %v50
    %v53 = vld [vmem:[#allocation2] sm:$0xff]
    %v54 = vld [vmem:[#allocation2 + $0x8] sm:$0x3f]
    %vm55 = vcmask 113664
    %v57 = vsel %vm55, %v51, 0
    %v60 = vsel %vm55, %v52, 0
    %vm62 = vcmask 1045504
    %v64 = vsel %vm62, %v54, 0
    %66 = vmatprep.subr.mxu0 0.0
    %67 = vmatpush1.msra.mxu0 0.0
    %68 = vmatprep.subr.mxu0 0.0
    %69 = vmatpush1.msra.mxu0 0.0
    %70 = vmatprep.subr.mxu0 0.0
    %71 = vmatpush1.msra.mxu0 0.0
    %72 = vmatprep.subr.mxu0 0.0
    %73 = vmatpush1.msra.mxu0 0.0
    %74 = vmatprep.subr.mxu0 0.0
    %75 = vmatpush1.msra.mxu0 0.0
    %76 = vmatprep.subr.mxu0 0.0
    %77 = vmatpush1.msra.mxu0 0.0
    %78 = vmatprep.subr.mxu0 0.0
    %79 = vmatpush1.msra.mxu0 0.0
    %80 = vmatprep.subr.mxu0 0.0
    %81 = vmatpush1.msra.mxu0 0.0
    %82 = vmatprep.subr.mxu0 0.0
    %83 = vmatpush1.msra.mxu0 0.0
    %84 = vmatprep.subr.mxu0 0.0
    %85 = vmatpush1.msra.mxu0 0.0
    %86 = vmatprep.subr.mxu0 0.0
    %87 = vmatpush1.msra.mxu0 0.0
    %88 = vmatprep.subr.mxu0 0.0
    %89 = vmatpush1.msra.mxu0 0.0
    %90 = vmatprep.subr.mxu0 0.0
    %91 = vmatpush1.msra.mxu0 0.0
    %92 = vmatprep.subr.mxu0 0.0
    %93 = vmatpush1.msra.mxu0 0.0
    %94 = vmatprep.subr.mxu0 0.0
    %95 = vmatpush1.msra.mxu0 %v64
    %96 = vmatprep.subr.mxu0 0.0
    %97 = vmatpush1.msra.mxu0 %v53
    %98 = vmatprep.subr.mxu0 0.0
    %99 = vmatpush2.msra.mxu0 0.0
    %100 = vmatprep.subr.mxu0 0.0
    %101 = vmatpush2.msra.mxu0 0.0
    %102 = vmatprep.subr.mxu0 0.0
    %103 = vmatpush2.msra.mxu0 0.0
    %104 = vmatprep.subr.mxu0 0.0
    %105 = vmatpush2.msra.mxu0 0.0
    %106 = vmatprep.subr.mxu0 0.0
    %107 = vmatpush2.msra.mxu0 0.0
    %108 = vmatprep.subr.mxu0 0.0
    %109 = vmatpush2.msra.mxu0 0.0
    %110 = vmatprep.subr.mxu0 0.0
    %111 = vmatpush2.msra.mxu0 0.0
    %112 = vmatprep.subr.mxu0 0.0
    %113 = vmatpush2.msra.mxu0 0.0
    %114 = vmatprep.subr.mxu0 0.0
    %115 = vmatpush2.msra.mxu0 0.0
    %116 = vmatprep.subr.mxu0 0.0
    %117 = vmatpush2.msra.mxu0 0.0
    %118 = vmatprep.subr.mxu0 0.0
    %119 = vmatpush2.msra.mxu0 0.0
    %120 = vmatprep.subr.mxu0 0.0
    %121 = vmatpush2.msra.mxu0 0.0
    %122 = vmatprep.subr.mxu0 0.0
    %123 = vmatpush2.msra.mxu0 0.0
    %124 = vmatprep.subr.mxu0 0.0
    %125 = vmatpush2.msra.mxu0 0.0
    %126 = vmatprep.subr.mxu0 0.0
    %127 = vmatpush2.msra.mxu0 0.0
    %128 = vmatprep.subr.mxu0 0.0
    %129 = vmatpush2.msra.mxu0 0.0
    %130 = vmatprep.mubr.f32.mxu0 0.0
    %131 = vmatmul.mubr.f32.gmra.mxu0 %v57
    %v132 = vpop.f32.mrf.mxu0
    %v133 = vadd.f32 0.0, %v132
    %v134 = vpop.f32.mrf.mxu0
    %135 = vmatprep.mubr.f32.mxu0 0.0
    %136 = vmatmul.mubr.f32.gmra.mxu0 %v60
    %v137 = vpop.f32.mrf.mxu0
    %v138 = vadd.f32 0.0, %v137
    %v139 = vpop.f32.mrf.mxu0
    %140 = vdwg.mxu0
    %v143 = vcombine.high %v133, %v133
    %v145 = vunpack.c.l.s4 1983009808
    %v146 = vunpack.c.0.s8 %v145
    %v147 = vlaneseq
    %v148 = vshrl.u32 %v147, 7
    %v149 = vsub.s32 %v146, %v148
    %v150 = vrot.slane %v133, %v149
    %v152 = vunpack.c.l.s4 1983009808
    %v153 = vunpack.c.0.s8 %v152
    %v154 = vlaneseq
    %v155 = vshrl.u32 %v154, 7
    %v156 = vsub.s32 %v153, %v155
    %v157 = vrot.slane %v143, %v156
    %v158 = vcombine.high %v150, %v150
    %v159 = vcombine.high %v157, %v157
    %v160 = vcombine.high %v138, %v138
    %v162 = vunpack.c.l.s4 1983009808
    %v163 = vunpack.c.0.s8 %v162
    %v164 = vlaneseq
    %v165 = vshrl.u32 %v164, 7
    %v166 = vsub.s32 %v163, %v165
    %v167 = vrot.slane %v138, %v166
    %v169 = vunpack.c.l.s4 1983009808
    %v170 = vunpack.c.0.s8 %v169
    %v171 = vlaneseq
    %v172 = vshrl.u32 %v171, 7
    %v173 = vsub.s32 %v170, %v172
    %v174 = vrot.slane %v160, %v173
    %v175 = vcombine.high %v167, %v167
    %v176 = vcombine.high %v174, %v174
    %v185 = vld [vmem:[%s2] sm:$0xff]
    %v186 = vld [vmem:[%s2 + $0x8] sm:$0xff]
    %v187 = vld [vmem:[%s2 + $0x10] sm:$0xff]
    %v188 = vld [vmem:[%s2 + $0x18] sm:$0xff]
    %v189 = vld [vmem:[%s3] sm:$0x1]
    %v190 = vld [vmem:[%s4] sm:$0x3]
    %vm191 = vcmask 261120
    %v193 = vsel %vm191, 0.0, 0
    %195 = vmatprep.subr.mxu0 0.0
    %196 = vmatpush1.msra.mxu0 0.0
    %197 = vmatprep.subr.mxu0 0.0
    %198 = vmatpush1.msra.mxu0 0.0
    %199 = vmatprep.subr.mxu0 0.0
    %200 = vmatpush1.msra.mxu0 0.0
    %201 = vmatprep.subr.mxu0 0.0
    %202 = vmatpush1.msra.mxu0 0.0
    %203 = vmatprep.subr.mxu0 0.0
    %204 = vmatpush1.msra.mxu0 0.0
    %205 = vmatprep.subr.mxu0 0.0
    %206 = vmatpush1.msra.mxu0 0.0
    %207 = vmatprep.subr.mxu0 0.0
    %208 = vmatpush1.msra.mxu0 0.0
    %209 = vmatprep.subr.mxu0 0.0
    %210 = vmatpush1.msra.mxu0 0.0
    %211 = vmatprep.subr.mxu0 0.0
    %212 = vmatpush1.msra.mxu0 0.0
    %213 = vmatprep.subr.mxu0 0.0
    %214 = vmatpush1.msra.mxu0 0.0
    %215 = vmatprep.subr.mxu0 0.0
    %216 = vmatpush1.msra.mxu0 0.0
    %217 = vmatprep.subr.mxu0 0.0
    %218 = vmatpush1.msra.mxu0 0.0
    %219 = vmatprep.subr.mxu0 0.0
    %220 = vmatpush1.msra.mxu0 %v188
    %221 = vmatprep.subr.mxu0 0.0
    %222 = vmatpush1.msra.mxu0 %v187
    %223 = vmatprep.subr.mxu0 0.0
    %224 = vmatpush1.msra.mxu0 %v186
    %225 = vmatprep.subr.mxu0 0.0
    %226 = vmatpush1.msra.mxu0 %v185
    %227 = vmatprep.subr.mxu0 0.0
    %228 = vmatpush2.msra.mxu0 0.0
    %229 = vmatprep.subr.mxu0 0.0
    %230 = vmatpush2.msra.mxu0 0.0
    %231 = vmatprep.subr.mxu0 0.0
    %232 = vmatpush2.msra.mxu0 0.0
    %233 = vmatprep.subr.mxu0 0.0
    %234 = vmatpush2.msra.mxu0 0.0
    %235 = vmatprep.subr.mxu0 0.0
    %236 = vmatpush2.msra.mxu0 0.0
    %237 = vmatprep.subr.mxu0 0.0
    %238 = vmatpush2.msra.mxu0 0.0
    %239 = vmatprep.subr.mxu0 0.0
    %240 = vmatpush2.msra.mxu0 0.0
    %241 = vmatprep.subr.mxu0 0.0
    %242 = vmatpush2.msra.mxu0 0.0
    %243 = vmatprep.subr.mxu0 0.0
    %244 = vmatpush2.msra.mxu0 0.0
    %245 = vmatprep.subr.mxu0 0.0
    %246 = vmatpush2.msra.mxu0 0.0
    %247 = vmatprep.subr.mxu0 0.0
    %248 = vmatpush2.msra.mxu0 0.0
    %249 = vmatprep.subr.mxu0 0.0
    %250 = vmatpush2.msra.mxu0 0.0
    %251 = vmatprep.subr.mxu0 0.0
    %252 = vmatpush2.msra.mxu0 0.0
    %253 = vmatprep.subr.mxu0 0.0
    %254 = vmatpush2.msra.mxu0 0.0
    %255 = vmatprep.subr.mxu0 0.0
    %256 = vmatpush2.msra.mxu0 0.0
    %257 = vmatprep.subr.mxu0 0.0
    %258 = vmatpush2.msra.mxu0 0.0
    %259 = vmatprep.mubr.f32.mxu0 0.0
    %260 = vmatmul.mubr.f32.gmra.mxu0 %v193
    %v261 = vpop.f32.mrf.mxu0
    %v262 = vadd.f32 0.0, %v261
    %v263 = vpop.f32.mrf.mxu0
    %264 = vdwg.mxu0
    %v265 = vadd.f32 %v150, %v262
    %v266 = vxor.u32 %v265, 2147483648
    %v267 = vmul.f32 %v266, 1.442695
    %v268 = vpow.pop %v267
    %v269 = vadd.f32 %v268, 1.0
    %v270 = vrcp.pop %v269
    %v271 = vmul.f32 1.0, %v270
    %v273 = vlaneseq
    %v274 = vshrl.u32 %v273, 7
    %v275 = vsub.s32 0, %v274
    %v276 = vrot.slane %v189, %v275
    %277 = vrot.lane.b32.xlu0 %v276, 64
    %v278 = vpop.permute.xlu0 %277
    %v280 = vadd.f32 %v262, %v278
    %v283 = vunpack.c.l.s4 1983009808
    %v284 = vunpack.c.0.s8 %v283
    %v285 = vlaneseq
    %v286 = vshrl.u32 %v285, 7
    %v287 = vsub.s32 %v284, %v286
    %v288 = vrot.slane %v280, %v287
    %289 = vrot.lane.b32.xlu0 %v288, 64
    %v290 = vpop.permute.xlu0 %289
    %v292 = vmul.f32 %v271, %v290
    %294 = vrot.lane.b32.xlu0 %v292, 64
    %v295 = vpop.permute.xlu0 %294
    %v297 = vadd.f32 %v150, %v295
    %v298 = vtanh.pop %v297
    %v299 = vsub.f32 0.0, %v298
    %301 = vrot.lane.b32.xlu0 %v299, 96
    %v302 = vpop.permute.xlu0 %301
    %v304 = vmul.f32 %v271, %v302
    %306 = vrot.lane.b32.xlu0 %v304, 32
    %v307 = vpop.permute.xlu0 %306
    %v309 = vadd.f32 %v298, %v307
    %vm310 = vcmp.gt.s32.totalorder %v190, 0
    %v311 = vsel %vm310, 1, 0
    %312 = vset.pattern.permute.xlu0 0
    %313 = vperm.xlu0 %312, %v311
    %v314 = vpop.permute.xlu0 %313
    %vm315 = vcmp.eq.s32.totalorder %v314, 1
    %v318 = vunpack.c.l.s4 1983009808
    %v319 = vunpack.c.0.s8 %v318
    %v320 = vlaneseq
    %v321 = vshrl.u32 %v320, 7
    %v322 = vsub.s32 %v319, %v321
    %v323 = vrot.slane %v309, %v322
    %324 = vrot.lane.b32.xlu0 %v323, 64
    %v325 = vpop.permute.xlu0 %324
    %v327 = vsel %vm315, %v325, 0.0
    %v329 = vsel %vm191, %v327, 0
    %331 = vmatprep.subr.mxu0 0.0
    %332 = vmatpush1.msra.mxu0 0.0
    %333 = vmatprep.subr.mxu0 0.0
    %334 = vmatpush1.msra.mxu0 0.0
    %335 = vmatprep.subr.mxu0 0.0
    %336 = vmatpush1.msra.mxu0 0.0
    %337 = vmatprep.subr.mxu0 0.0
    %338 = vmatpush1.msra.mxu0 0.0
    %339 = vmatprep.subr.mxu0 0.0
    %340 = vmatpush1.msra.mxu0 0.0
    %341 = vmatprep.subr.mxu0 0.0
    %342 = vmatpush1.msra.mxu0 0.0
    %343 = vmatprep.subr.mxu0 0.0
    %344 = vmatpush1.msra.mxu0 0.0
    %345 = vmatprep.subr.mxu0 0.0
    %346 = vmatpush1.msra.mxu0 0.0
    %347 = vmatprep.subr.mxu0 0.0
    %348 = vmatpush1.msra.mxu0 0.0
    %349 = vmatprep.subr.mxu0 0.0
    %350 = vmatpush1.msra.mxu0 0.0
    %351 = vmatprep.subr.mxu0 0.0
    %352 = vmatpush1.msra.mxu0 0.0
    %353 = vmatprep.subr.mxu0 0.0
    %354 = vmatpush1.msra.mxu0 0.0
    %355 = vmatprep.subr.mxu0 0.0
    %356 = vmatpush1.msra.mxu0 %v188
    %357 = vmatprep.subr.mxu0 0.0
    %358 = vmatpush1.msra.mxu0 %v187
    %359 = vmatprep.subr.mxu0 0.0
    %360 = vmatpush1.msra.mxu0 %v186
    %361 = vmatprep.subr.mxu0 0.0
    %362 = vmatpush1.msra.mxu0 %v185
    %363 = vmatprep.subr.mxu0 0.0
    %364 = vmatpush2.msra.mxu0 0.0
    %365 = vmatprep.subr.mxu0 0.0
    %366 = vmatpush2.msra.mxu0 0.0
    %367 = vmatprep.subr.mxu0 0.0
    %368 = vmatpush2.msra.mxu0 0.0
    %369 = vmatprep.subr.mxu0 0.0
    %370 = vmatpush2.msra.mxu0 0.0
    %371 = vmatprep.subr.mxu0 0.0
    %372 = vmatpush2.msra.mxu0 0.0
    %373 = vmatprep.subr.mxu0 0.0
    %374 = vmatpush2.msra.mxu0 0.0
    %375 = vmatprep.subr.mxu0 0.0
    %376 = vmatpush2.msra.mxu0 0.0
    %377 = vmatprep.subr.mxu0 0.0
    %378 = vmatpush2.msra.mxu0 0.0
    %379 = vmatprep.subr.mxu0 0.0
    %380 = vmatpush2.msra.mxu0 0.0
    %381 = vmatprep.subr.mxu0 0.0
    %382 = vmatpush2.msra.mxu0 0.0
    %383 = vmatprep.subr.mxu0 0.0
    %384 = vmatpush2.msra.mxu0 0.0
    %385 = vmatprep.subr.mxu0 0.0
    %386 = vmatpush2.msra.mxu0 0.0
    %387 = vmatprep.subr.mxu0 0.0
    %388 = vmatpush2.msra.mxu0 0.0
    %389 = vmatprep.subr.mxu0 0.0
    %390 = vmatpush2.msra.mxu0 0.0
    %391 = vmatprep.subr.mxu0 0.0
    %392 = vmatpush2.msra.mxu0 0.0
    %393 = vmatprep.subr.mxu0 0.0
    %394 = vmatpush2.msra.mxu0 0.0
    %395 = vmatprep.mubr.f32.mxu0 0.0
    %396 = vmatmul.mubr.f32.gmra.mxu0 %v329
    %v397 = vpop.f32.mrf.mxu0
    %v398 = vadd.f32 0.0, %v397
    %v399 = vpop.f32.mrf.mxu0
    %400 = vdwg.mxu0
    %v401 = vadd.f32 %v158, %v398
    %v402 = vxor.u32 %v401, 2147483648
    %v403 = vmul.f32 %v402, 1.442695
    %v404 = vpow.pop %v403
    %v405 = vadd.f32 %v404, 1.0
    %v406 = vrcp.pop %v405
    %v407 = vmul.f32 1.0, %v406
    %v408 = vadd.f32 %v398, %v278
    %v411 = vunpack.c.l.s4 1983009808
    %v412 = vunpack.c.0.s8 %v411
    %v413 = vlaneseq
    %v414 = vshrl.u32 %v413, 7
    %v415 = vsub.s32 %v412, %v414
    %v416 = vrot.slane %v408, %v415
    %417 = vrot.lane.b32.xlu0 %v416, 64
    %v418 = vpop.permute.xlu0 %417
    %v420 = vmul.f32 %v407, %v418
    %422 = vrot.lane.b32.xlu0 %v420, 64
    %v423 = vpop.permute.xlu0 %422
    %v425 = vadd.f32 %v158, %v423
    %v426 = vtanh.pop %v425
    %v429 = vunpack.c.l.s4 1983009808
    %v430 = vunpack.c.0.s8 %v429
    %v431 = vlaneseq
    %v432 = vshrl.u32 %v431, 7
    %v433 = vsub.s32 %v430, %v432
    %v434 = vrot.slane %v426, %v433
    %435 = vrot.lane.b32.xlu0 %v434, 64
    %v436 = vpop.permute.xlu0 %435
    %v438 = vsub.f32 %v327, %v436
    %v441 = vunpack.c.l.s4 1983009808
    %v442 = vunpack.c.0.s8 %v441
    %v443 = vlaneseq
    %v444 = vshrl.u32 %v443, 7
    %v445 = vsub.s32 %v442, %v444
    %v446 = vrot.slane %v438, %v445
    %447 = vrot.lane.b32.xlu0 %v446, 32
    %v448 = vpop.permute.xlu0 %447
    %v450 = vmul.f32 %v407, %v448
    %452 = vrot.lane.b32.xlu0 %v450, 32
    %v453 = vpop.permute.xlu0 %452
    %v455 = vadd.f32 %v426, %v453
    %vm456 = vcmp.gt.s32.totalorder %v190, 1
    %v457 = vsel %vm456, 1, 0
    %458 = vset.pattern.permute.xlu0 0
    %459 = vperm.xlu0 %458, %v457
    %v460 = vpop.permute.xlu0 %459
    %vm461 = vcmp.eq.s32.totalorder %v460, 1
    %v464 = vunpack.c.l.s4 1983009808
    %v465 = vunpack.c.0.s8 %v464
    %v466 = vlaneseq
    %v467 = vshrl.u32 %v466, 7
    %v468 = vsub.s32 %v465, %v467
    %v469 = vrot.slane %v455, %v468
    %470 = vrot.lane.b32.xlu0 %v469, 64
    %v471 = vpop.permute.xlu0 %470
    %v473 = vsel %vm461, %v471, %v327
    %v474 = vsel %vm461, %v471, 0.0
    %v476 = vsel %vm191, %v473, 0
    %478 = vmatprep.subr.mxu0 0.0
    %479 = vmatpush1.msra.mxu0 0.0
    %480 = vmatprep.subr.mxu0 0.0
    %481 = vmatpush1.msra.mxu0 0.0
    %482 = vmatprep.subr.mxu0 0.0
    %483 = vmatpush1.msra.mxu0 0.0
    %484 = vmatprep.subr.mxu0 0.0
    %485 = vmatpush1.msra.mxu0 0.0
    %486 = vmatprep.subr.mxu0 0.0
    %487 = vmatpush1.msra.mxu0 0.0
    %488 = vmatprep.subr.mxu0 0.0
    %489 = vmatpush1.msra.mxu0 0.0
    %490 = vmatprep.subr.mxu0 0.0
    %491 = vmatpush1.msra.mxu0 0.0
    %492 = vmatprep.subr.mxu0 0.0
    %493 = vmatpush1.msra.mxu0 0.0
    %494 = vmatprep.subr.mxu0 0.0
    %495 = vmatpush1.msra.mxu0 0.0
    %496 = vmatprep.subr.mxu0 0.0
    %497 = vmatpush1.msra.mxu0 0.0
    %498 = vmatprep.subr.mxu0 0.0
    %499 = vmatpush1.msra.mxu0 0.0
    %500 = vmatprep.subr.mxu0 0.0
    %501 = vmatpush1.msra.mxu0 0.0
    %502 = vmatprep.subr.mxu0 0.0
    %503 = vmatpush1.msra.mxu0 %v188
    %504 = vmatprep.subr.mxu0 0.0
    %505 = vmatpush1.msra.mxu0 %v187
    %506 = vmatprep.subr.mxu0 0.0
    %507 = vmatpush1.msra.mxu0 %v186
    %508 = vmatprep.subr.mxu0 0.0
    %509 = vmatpush1.msra.mxu0 %v185
    %510 = vmatprep.subr.mxu0 0.0
    %511 = vmatpush2.msra.mxu0 0.0
    %512 = vmatprep.subr.mxu0 0.0
    %513 = vmatpush2.msra.mxu0 0.0
    %514 = vmatprep.subr.mxu0 0.0
    %515 = vmatpush2.msra.mxu0 0.0
    %516 = vmatprep.subr.mxu0 0.0
    %517 = vmatpush2.msra.mxu0 0.0
    %518 = vmatprep.subr.mxu0 0.0
    %519 = vmatpush2.msra.mxu0 0.0
    %520 = vmatprep.subr.mxu0 0.0
    %521 = vmatpush2.msra.mxu0 0.0
    %522 = vmatprep.subr.mxu0 0.0
    %523 = vmatpush2.msra.mxu0 0.0
    %524 = vmatprep.subr.mxu0 0.0
    %525 = vmatpush2.msra.mxu0 0.0
    %526 = vmatprep.subr.mxu0 0.0
    %527 = vmatpush2.msra.mxu0 0.0
    %528 = vmatprep.subr.mxu0 0.0
    %529 = vmatpush2.msra.mxu0 0.0
    %530 = vmatprep.subr.mxu0 0.0
    %531 = vmatpush2.msra.mxu0 0.0
    %532 = vmatprep.subr.mxu0 0.0
    %533 = vmatpush2.msra.mxu0 0.0
    %534 = vmatprep.subr.mxu0 0.0
    %535 = vmatpush2.msra.mxu0 0.0
    %536 = vmatprep.subr.mxu0 0.0
    %537 = vmatpush2.msra.mxu0 0.0
    %538 = vmatprep.subr.mxu0 0.0
    %539 = vmatpush2.msra.mxu0 0.0
    %540 = vmatprep.subr.mxu0 0.0
    %541 = vmatpush2.msra.mxu0 0.0
    %542 = vmatprep.mubr.f32.mxu0 0.0
    %543 = vmatmul.mubr.f32.gmra.mxu0 %v476
    %v544 = vpop.f32.mrf.mxu0
    %v545 = vadd.f32 0.0, %v544
    %v546 = vpop.f32.mrf.mxu0
    %547 = vdwg.mxu0
    %v548 = vadd.f32 %v157, %v545
    %v549 = vxor.u32 %v548, 2147483648
    %v550 = vmul.f32 %v549, 1.442695
    %v551 = vpow.pop %v550
    %v552 = vadd.f32 %v551, 1.0
    %v553 = vrcp.pop %v552
    %v554 = vmul.f32 1.0, %v553
    %v555 = vadd.f32 %v545, %v278
    %v558 = vunpack.c.l.s4 1983009808
    %v559 = vunpack.c.0.s8 %v558
    %v560 = vlaneseq
    %v561 = vshrl.u32 %v560, 7
    %v562 = vsub.s32 %v559, %v561
    %v563 = vrot.slane %v555, %v562
    %564 = vrot.lane.b32.xlu0 %v563, 64
    %v565 = vpop.permute.xlu0 %564
    %v567 = vmul.f32 %v554, %v565
    %569 = vrot.lane.b32.xlu0 %v567, 64
    %v570 = vpop.permute.xlu0 %569
    %v572 = vadd.f32 %v157, %v570
    %v573 = vtanh.pop %v572
    %v576 = vunpack.c.l.s4 1983009808
    %v577 = vunpack.c.0.s8 %v576
    %v578 = vlaneseq
    %v579 = vshrl.u32 %v578, 7
    %v580 = vsub.s32 %v577, %v579
    %v581 = vrot.slane %v573, %v580
    %582 = vrot.lane.b32.xlu0 %v581, 64
    %v583 = vpop.permute.xlu0 %582
    %v585 = vsub.f32 %v473, %v583
    %v588 = vunpack.c.l.s4 1983009808
    %v589 = vunpack.c.0.s8 %v588
    %v590 = vlaneseq
    %v591 = vshrl.u32 %v590, 7
    %v592 = vsub.s32 %v589, %v591
    %v593 = vrot.slane %v585, %v592
    %594 = vrot.lane.b32.xlu0 %v593, 32
    %v595 = vpop.permute.xlu0 %594
    %v597 = vmul.f32 %v554, %v595
    %599 = vrot.lane.b32.xlu0 %v597, 32
    %v600 = vpop.permute.xlu0 %599
    %v602 = vadd.f32 %v573, %v600
    %vm603 = vcmp.gt.s32.totalorder %v190, 2
    %v604 = vsel %vm603, 1, 0
    %605 = vset.pattern.permute.xlu0 0
    %606 = vperm.xlu0 %605, %v604
    %v607 = vpop.permute.xlu0 %606
    %vm608 = vcmp.eq.s32.totalorder %v607, 1
    %v611 = vunpack.c.l.s4 1983009808
    %v612 = vunpack.c.0.s8 %v611
    %v613 = vlaneseq
    %v614 = vshrl.u32 %v613, 7
    %v615 = vsub.s32 %v612, %v614
    %v616 = vrot.slane %v602, %v615
    %617 = vrot.lane.b32.xlu0 %v616, 64
    %v618 = vpop.permute.xlu0 %617
    %v620 = vsel %vm608, %v618, %v473
    %v621 = vsel %vm608, %v618, 0.0
    %v623 = vsel %vm191, %v620, 0
    %625 = vmatprep.subr.mxu0 0.0
    %626 = vmatpush1.msra.mxu0 0.0
    %627 = vmatprep.subr.mxu0 0.0
    %628 = vmatpush1.msra.mxu0 0.0
    %629 = vmatprep.subr.mxu0 0.0
    %630 = vmatpush1.msra.mxu0 0.0
    %631 = vmatprep.subr.mxu0 0.0
    %632 = vmatpush1.msra.mxu0 0.0
    %633 = vmatprep.subr.mxu0 0.0
    %634 = vmatpush1.msra.mxu0 0.0
    %635 = vmatprep.subr.mxu0 0.0
    %636 = vmatpush1.msra.mxu0 0.0
    %637 = vmatprep.subr.mxu0 0.0
    %638 = vmatpush1.msra.mxu0 0.0
    %639 = vmatprep.subr.mxu0 0.0
    %640 = vmatpush1.msra.mxu0 0.0
    %641 = vmatprep.subr.mxu0 0.0
    %642 = vmatpush1.msra.mxu0 0.0
    %643 = vmatprep.subr.mxu0 0.0
    %644 = vmatpush1.msra.mxu0 0.0
    %645 = vmatprep.subr.mxu0 0.0
    %646 = vmatpush1.msra.mxu0 0.0
    %647 = vmatprep.subr.mxu0 0.0
    %648 = vmatpush1.msra.mxu0 0.0
    %649 = vmatprep.subr.mxu0 0.0
    %650 = vmatpush1.msra.mxu0 %v188
    %651 = vmatprep.subr.mxu0 0.0
    %652 = vmatpush1.msra.mxu0 %v187
    %653 = vmatprep.subr.mxu0 0.0
    %654 = vmatpush1.msra.mxu0 %v186
    %655 = vmatprep.subr.mxu0 0.0
    %656 = vmatpush1.msra.mxu0 %v185
    %657 = vmatprep.subr.mxu0 0.0
    %658 = vmatpush2.msra.mxu0 0.0
    %659 = vmatprep.subr.mxu0 0.0
    %660 = vmatpush2.msra.mxu0 0.0
    %661 = vmatprep.subr.mxu0 0.0
    %662 = vmatpush2.msra.mxu0 0.0
    %663 = vmatprep.subr.mxu0 0.0
    %664 = vmatpush2.msra.mxu0 0.0
    %665 = vmatprep.subr.mxu0 0.0
    %666 = vmatpush2.msra.mxu0 0.0
    %667 = vmatprep.subr.mxu0 0.0
    %668 = vmatpush2.msra.mxu0 0.0
    %669 = vmatprep.subr.mxu0 0.0
    %670 = vmatpush2.msra.mxu0 0.0
    %671 = vmatprep.subr.mxu0 0.0
    %672 = vmatpush2.msra.mxu0 0.0
    %673 = vmatprep.subr.mxu0 0.0
    %674 = vmatpush2.msra.mxu0 0.0
    %675 = vmatprep.subr.mxu0 0.0
    %676 = vmatpush2.msra.mxu0 0.0
    %677 = vmatprep.subr.mxu0 0.0
    %678 = vmatpush2.msra.mxu0 0.0
    %679 = vmatprep.subr.mxu0 0.0
    %680 = vmatpush2.msra.mxu0 0.0
    %681 = vmatprep.subr.mxu0 0.0
    %682 = vmatpush2.msra.mxu0 0.0
    %683 = vmatprep.subr.mxu0 0.0
    %684 = vmatpush2.msra.mxu0 0.0
    %685 = vmatprep.subr.mxu0 0.0
    %686 = vmatpush2.msra.mxu0 0.0
    %687 = vmatprep.subr.mxu0 0.0
    %688 = vmatpush2.msra.mxu0 0.0
    %689 = vmatprep.mubr.f32.mxu0 0.0
    %690 = vmatmul.mubr.f32.gmra.mxu0 %v623
    %v691 = vpop.f32.mrf.mxu0
    %v692 = vadd.f32 0.0, %v691
    %v693 = vpop.f32.mrf.mxu0
    %694 = vdwg.mxu0
    %v695 = vadd.f32 %v159, %v692
    %v696 = vxor.u32 %v695, 2147483648
    %v697 = vmul.f32 %v696, 1.442695
    %v698 = vpow.pop %v697
    %v699 = vadd.f32 %v698, 1.0
    %v700 = vrcp.pop %v699
    %v701 = vmul.f32 1.0, %v700
    %v702 = vadd.f32 %v692, %v278
    %v705 = vunpack.c.l.s4 1983009808
    %v706 = vunpack.c.0.s8 %v705
    %v707 = vlaneseq
    %v708 = vshrl.u32 %v707, 7
    %v709 = vsub.s32 %v706, %v708
    %v710 = vrot.slane %v702, %v709
    %711 = vrot.lane.b32.xlu0 %v710, 64
    %v712 = vpop.permute.xlu0 %711
    %v714 = vmul.f32 %v701, %v712
    %716 = vrot.lane.b32.xlu0 %v714, 64
    %v717 = vpop.permute.xlu0 %716
    %v719 = vadd.f32 %v159, %v717
    %v720 = vtanh.pop %v719
    %v723 = vunpack.c.l.s4 1983009808
    %v724 = vunpack.c.0.s8 %v723
    %v725 = vlaneseq
    %v726 = vshrl.u32 %v725, 7
    %v727 = vsub.s32 %v724, %v726
    %v728 = vrot.slane %v720, %v727
    %729 = vrot.lane.b32.xlu0 %v728, 64
    %v730 = vpop.permute.xlu0 %729
    %v732 = vsub.f32 %v620, %v730
    %v735 = vunpack.c.l.s4 1983009808
    %v736 = vunpack.c.0.s8 %v735
    %v737 = vlaneseq
    %v738 = vshrl.u32 %v737, 7
    %v739 = vsub.s32 %v736, %v738
    %v740 = vrot.slane %v732, %v739
    %741 = vrot.lane.b32.xlu0 %v740, 32
    %v742 = vpop.permute.xlu0 %741
    %v744 = vmul.f32 %v701, %v742
    %746 = vrot.lane.b32.xlu0 %v744, 32
    %v747 = vpop.permute.xlu0 %746
    %v749 = vadd.f32 %v720, %v747
    %vm750 = vcmp.gt.s32.totalorder %v190, 3
    %v751 = vsel %vm750, 1, 0
    %752 = vset.pattern.permute.xlu0 0
    %753 = vperm.xlu0 %752, %v751
    %v754 = vpop.permute.xlu0 %753
    %vm755 = vcmp.eq.s32.totalorder %v754, 1
    %v758 = vunpack.c.l.s4 1983009808
    %v759 = vunpack.c.0.s8 %v758
    %v760 = vlaneseq
    %v761 = vshrl.u32 %v760, 7
    %v762 = vsub.s32 %v759, %v761
    %v763 = vrot.slane %v749, %v762
    %764 = vrot.lane.b32.xlu0 %v763, 64
    %v765 = vpop.permute.xlu0 %764
    %v767 = vsel %vm755, %v765, %v620
    %v768 = vsel %vm755, %v765, 0.0
    %v770 = vsel %vm191, %v767, 0
    %772 = vmatprep.subr.mxu0 0.0
    %773 = vmatpush1.msra.mxu0 0.0
    %774 = vmatprep.subr.mxu0 0.0
    %775 = vmatpush1.msra.mxu0 0.0
    %776 = vmatprep.subr.mxu0 0.0
    %777 = vmatpush1.msra.mxu0 0.0
    %778 = vmatprep.subr.mxu0 0.0
    %779 = vmatpush1.msra.mxu0 0.0
    %780 = vmatprep.subr.mxu0 0.0
    %781 = vmatpush1.msra.mxu0 0.0
    %782 = vmatprep.subr.mxu0 0.0
    %783 = vmatpush1.msra.mxu0 0.0
    %784 = vmatprep.subr.mxu0 0.0
    %785 = vmatpush1.msra.mxu0 0.0
    %786 = vmatprep.subr.mxu0 0.0
    %787 = vmatpush1.msra.mxu0 0.0
    %788 = vmatprep.subr.mxu0 0.0
    %789 = vmatpush1.msra.mxu0 0.0
    %790 = vmatprep.subr.mxu0 0.0
    %791 = vmatpush1.msra.mxu0 0.0
    %792 = vmatprep.subr.mxu0 0.0
    %793 = vmatpush1.msra.mxu0 0.0
    %794 = vmatprep.subr.mxu0 0.0
    %795 = vmatpush1.msra.mxu0 0.0
    %796 = vmatprep.subr.mxu0 0.0
    %797 = vmatpush1.msra.mxu0 %v188
    %798 = vmatprep.subr.mxu0 0.0
    %799 = vmatpush1.msra.mxu0 %v187
    %800 = vmatprep.subr.mxu0 0.0
    %801 = vmatpush1.msra.mxu0 %v186
    %802 = vmatprep.subr.mxu0 0.0
    %803 = vmatpush1.msra.mxu0 %v185
    %804 = vmatprep.subr.mxu0 0.0
    %805 = vmatpush2.msra.mxu0 0.0
    %806 = vmatprep.subr.mxu0 0.0
    %807 = vmatpush2.msra.mxu0 0.0
    %808 = vmatprep.subr.mxu0 0.0
    %809 = vmatpush2.msra.mxu0 0.0
    %810 = vmatprep.subr.mxu0 0.0
    %811 = vmatpush2.msra.mxu0 0.0
    %812 = vmatprep.subr.mxu0 0.0
    %813 = vmatpush2.msra.mxu0 0.0
    %814 = vmatprep.subr.mxu0 0.0
    %815 = vmatpush2.msra.mxu0 0.0
    %816 = vmatprep.subr.mxu0 0.0
    %817 = vmatpush2.msra.mxu0 0.0
    %818 = vmatprep.subr.mxu0 0.0
    %819 = vmatpush2.msra.mxu0 0.0
    %820 = vmatprep.subr.mxu0 0.0
    %821 = vmatpush2.msra.mxu0 0.0
    %822 = vmatprep.subr.mxu0 0.0
    %823 = vmatpush2.msra.mxu0 0.0
    %824 = vmatprep.subr.mxu0 0.0
    %825 = vmatpush2.msra.mxu0 0.0
    %826 = vmatprep.subr.mxu0 0.0
    %827 = vmatpush2.msra.mxu0 0.0
    %828 = vmatprep.subr.mxu0 0.0
    %829 = vmatpush2.msra.mxu0 0.0
    %830 = vmatprep.subr.mxu0 0.0
    %831 = vmatpush2.msra.mxu0 0.0
    %832 = vmatprep.subr.mxu0 0.0
    %833 = vmatpush2.msra.mxu0 0.0
    %834 = vmatprep.subr.mxu0 0.0
    %835 = vmatpush2.msra.mxu0 0.0
    %836 = vmatprep.mubr.f32.mxu0 0.0
    %837 = vmatmul.mubr.f32.gmra.mxu0 %v770
    %v838 = vpop.f32.mrf.mxu0
    %v839 = vadd.f32 0.0, %v838
    %v840 = vpop.f32.mrf.mxu0
    %841 = vdwg.mxu0
    %v842 = vadd.f32 %v167, %v839
    %v843 = vxor.u32 %v842, 2147483648
    %v844 = vmul.f32 %v843, 1.442695
    %v845 = vpow.pop %v844
    %v846 = vadd.f32 %v845, 1.0
    %v847 = vrcp.pop %v846
    %v848 = vmul.f32 1.0, %v847
    %v849 = vadd.f32 %v839, %v278
    %v852 = vunpack.c.l.s4 1983009808
    %v853 = vunpack.c.0.s8 %v852
    %v854 = vlaneseq
    %v855 = vshrl.u32 %v854, 7
    %v856 = vsub.s32 %v853, %v855
    %v857 = vrot.slane %v849, %v856
    %858 = vrot.lane.b32.xlu0 %v857, 64
    %v859 = vpop.permute.xlu0 %858
    %v861 = vmul.f32 %v848, %v859
    %863 = vrot.lane.b32.xlu0 %v861, 64
    %v864 = vpop.permute.xlu0 %863
    %v866 = vadd.f32 %v167, %v864
    %v867 = vtanh.pop %v866
    %v870 = vunpack.c.l.s4 1983009808
    %v871 = vunpack.c.0.s8 %v870
    %v872 = vlaneseq
    %v873 = vshrl.u32 %v872, 7
    %v874 = vsub.s32 %v871, %v873
    %v875 = vrot.slane %v867, %v874
    %876 = vrot.lane.b32.xlu0 %v875, 64
    %v877 = vpop.permute.xlu0 %876
    %v879 = vsub.f32 %v767, %v877
    %v882 = vunpack.c.l.s4 1983009808
    %v883 = vunpack.c.0.s8 %v882
    %v884 = vlaneseq
    %v885 = vshrl.u32 %v884, 7
    %v886 = vsub.s32 %v883, %v885
    %v887 = vrot.slane %v879, %v886
    %888 = vrot.lane.b32.xlu0 %v887, 32
    %v889 = vpop.permute.xlu0 %888
    %v891 = vmul.f32 %v848, %v889
    %893 = vrot.lane.b32.xlu0 %v891, 32
    %v894 = vpop.permute.xlu0 %893
    %v896 = vadd.f32 %v867, %v894
    %vm897 = vcmp.gt.s32.totalorder %v190, 4
    %v898 = vsel %vm897, 1, 0
    %899 = vset.pattern.permute.xlu0 0
    %900 = vperm.xlu0 %899, %v898
    %v901 = vpop.permute.xlu0 %900
    %vm902 = vcmp.eq.s32.totalorder %v901, 1
    %v905 = vunpack.c.l.s4 1983009808
    %v906 = vunpack.c.0.s8 %v905
    %v907 = vlaneseq
    %v908 = vshrl.u32 %v907, 7
    %v909 = vsub.s32 %v906, %v908
    %v910 = vrot.slane %v896, %v909
    %911 = vrot.lane.b32.xlu0 %v910, 64
    %v912 = vpop.permute.xlu0 %911
    %v914 = vsel %vm902, %v912, %v767
    %v915 = vsel %vm902, %v912, 0.0
    %v917 = vsel %vm191, %v914, 0
    %919 = vmatprep.subr.mxu0 0.0
    %920 = vmatpush1.msra.mxu0 0.0
    %921 = vmatprep.subr.mxu0 0.0
    %922 = vmatpush1.msra.mxu0 0.0
    %923 = vmatprep.subr.mxu0 0.0
    %924 = vmatpush1.msra.mxu0 0.0
    %925 = vmatprep.subr.mxu0 0.0
    %926 = vmatpush1.msra.mxu0 0.0
    %927 = vmatprep.subr.mxu0 0.0
    %928 = vmatpush1.msra.mxu0 0.0
    %929 = vmatprep.subr.mxu0 0.0
    %930 = vmatpush1.msra.mxu0 0.0
    %931 = vmatprep.subr.mxu0 0.0
    %932 = vmatpush1.msra.mxu0 0.0
    %933 = vmatprep.subr.mxu0 0.0
    %934 = vmatpush1.msra.mxu0 0.0
    %935 = vmatprep.subr.mxu0 0.0
    %936 = vmatpush1.msra.mxu0 0.0
    %937 = vmatprep.subr.mxu0 0.0
    %938 = vmatpush1.msra.mxu0 0.0
    %939 = vmatprep.subr.mxu0 0.0
    %940 = vmatpush1.msra.mxu0 0.0
    %941 = vmatprep.subr.mxu0 0.0
    %942 = vmatpush1.msra.mxu0 0.0
    %943 = vmatprep.subr.mxu0 0.0
    %944 = vmatpush1.msra.mxu0 %v188
    %945 = vmatprep.subr.mxu0 0.0
    %946 = vmatpush1.msra.mxu0 %v187
    %947 = vmatprep.subr.mxu0 0.0
    %948 = vmatpush1.msra.mxu0 %v186
    %949 = vmatprep.subr.mxu0 0.0
    %950 = vmatpush1.msra.mxu0 %v185
    %951 = vmatprep.subr.mxu0 0.0
    %952 = vmatpush2.msra.mxu0 0.0
    %953 = vmatprep.subr.mxu0 0.0
    %954 = vmatpush2.msra.mxu0 0.0
    %955 = vmatprep.subr.mxu0 0.0
    %956 = vmatpush2.msra.mxu0 0.0
    %957 = vmatprep.subr.mxu0 0.0
    %958 = vmatpush2.msra.mxu0 0.0
    %959 = vmatprep.subr.mxu0 0.0
    %960 = vmatpush2.msra.mxu0 0.0
    %961 = vmatprep.subr.mxu0 0.0
    %962 = vmatpush2.msra.mxu0 0.0
    %963 = vmatprep.subr.mxu0 0.0
    %964 = vmatpush2.msra.mxu0 0.0
    %965 = vmatprep.subr.mxu0 0.0
    %966 = vmatpush2.msra.mxu0 0.0
    %967 = vmatprep.subr.mxu0 0.0
    %968 = vmatpush2.msra.mxu0 0.0
    %969 = vmatprep.subr.mxu0 0.0
    %970 = vmatpush2.msra.mxu0 0.0
    %971 = vmatprep.subr.mxu0 0.0
    %972 = vmatpush2.msra.mxu0 0.0
    %973 = vmatprep.subr.mxu0 0.0
    %974 = vmatpush2.msra.mxu0 0.0
    %975 = vmatprep.subr.mxu0 0.0
    %976 = vmatpush2.msra.mxu0 0.0
    %977 = vmatprep.subr.mxu0 0.0
    %978 = vmatpush2.msra.mxu0 0.0
    %979 = vmatprep.subr.mxu0 0.0
    %980 = vmatpush2.msra.mxu0 0.0
    %981 = vmatprep.subr.mxu0 0.0
    %982 = vmatpush2.msra.mxu0 0.0
    %983 = vmatprep.mubr.f32.mxu0 0.0
    %984 = vmatmul.mubr.f32.gmra.mxu0 %v917
    %v985 = vpop.f32.mrf.mxu0
    %v986 = vadd.f32 0.0, %v985
    %v987 = vpop.f32.mrf.mxu0
    %988 = vdwg.mxu0
    %v989 = vadd.f32 %v175, %v986
    %v990 = vxor.u32 %v989, 2147483648
    %v991 = vmul.f32 %v990, 1.442695
    %v992 = vpow.pop %v991
    %v993 = vadd.f32 %v992, 1.0
    %v994 = vrcp.pop %v993
    %v995 = vmul.f32 1.0, %v994
    %v996 = vadd.f32 %v986, %v278
    %v999 = vunpack.c.l.s4 1983009808
    %v1000 = vunpack.c.0.s8 %v999
    %v1001 = vlaneseq
    %v1002 = vshrl.u32 %v1001, 7
    %v1003 = vsub.s32 %v1000, %v1002
    %v1004 = vrot.slane %v996, %v1003
    %1005 = vrot.lane.b32.xlu0 %v1004, 64
    %v1006 = vpop.permute.xlu0 %1005
    %v1008 = vmul.f32 %v995, %v1006
    %1010 = vrot.lane.b32.xlu0 %v1008, 64
    %v1011 = vpop.permute.xlu0 %1010
    %v1013 = vadd.f32 %v175, %v1011
    %v1014 = vtanh.pop %v1013
    %v1017 = vunpack.c.l.s4 1983009808
    %v1018 = vunpack.c.0.s8 %v1017
    %v1019 = vlaneseq
    %v1020 = vshrl.u32 %v1019, 7
    %v1021 = vsub.s32 %v1018, %v1020
    %v1022 = vrot.slane %v1014, %v1021
    %1023 = vrot.lane.b32.xlu0 %v1022, 64
    %v1024 = vpop.permute.xlu0 %1023
    %v1026 = vsub.f32 %v914, %v1024
    %v1029 = vunpack.c.l.s4 1983009808
    %v1030 = vunpack.c.0.s8 %v1029
    %v1031 = vlaneseq
    %v1032 = vshrl.u32 %v1031, 7
    %v1033 = vsub.s32 %v1030, %v1032
    %v1034 = vrot.slane %v1026, %v1033
    %1035 = vrot.lane.b32.xlu0 %v1034, 32
    %v1036 = vpop.permute.xlu0 %1035
    %v1038 = vmul.f32 %v995, %v1036
    %1040 = vrot.lane.b32.xlu0 %v1038, 32
    %v1041 = vpop.permute.xlu0 %1040
    %v1043 = vadd.f32 %v1014, %v1041
    %vm1044 = vcmp.gt.s32.totalorder %v190, 5
    %v1045 = vsel %vm1044, 1, 0
    %1046 = vset.pattern.permute.xlu0 0
    %1047 = vperm.xlu0 %1046, %v1045
    %v1048 = vpop.permute.xlu0 %1047
    %vm1049 = vcmp.eq.s32.totalorder %v1048, 1
    %v1052 = vunpack.c.l.s4 1983009808
    %v1053 = vunpack.c.0.s8 %v1052
    %v1054 = vlaneseq
    %v1055 = vshrl.u32 %v1054, 7
    %v1056 = vsub.s32 %v1053, %v1055
    %v1057 = vrot.slane %v1043, %v1056
    %1058 = vrot.lane.b32.xlu0 %v1057, 64
    %v1059 = vpop.permute.xlu0 %1058
    %v1061 = vsel %vm1049, %v1059, %v914
    %v1062 = vsel %vm1049, %v1059, 0.0
    %v1064 = vsel %vm191, %v1061, 0
    %1066 = vmatprep.subr.mxu0 0.0
    %1067 = vmatpush1.msra.mxu0 0.0
    %1068 = vmatprep.subr.mxu0 0.0
    %1069 = vmatpush1.msra.mxu0 0.0
    %1070 = vmatprep.subr.mxu0 0.0
    %1071 = vmatpush1.msra.mxu0 0.0
    %1072 = vmatprep.subr.mxu0 0.0
    %1073 = vmatpush1.msra.mxu0 0.0
    %1074 = vmatprep.subr.mxu0 0.0
    %1075 = vmatpush1.msra.mxu0 0.0
    %1076 = vmatprep.subr.mxu0 0.0
    %1077 = vmatpush1.msra.mxu0 0.0
    %1078 = vmatprep.subr.mxu0 0.0
    %1079 = vmatpush1.msra.mxu0 0.0
    %1080 = vmatprep.subr.mxu0 0.0
    %1081 = vmatpush1.msra.mxu0 0.0
    %1082 = vmatprep.subr.mxu0 0.0
    %1083 = vmatpush1.msra.mxu0 0.0
    %1084 = vmatprep.subr.mxu0 0.0
    %1085 = vmatpush1.msra.mxu0 0.0
    %1086 = vmatprep.subr.mxu0 0.0
    %1087 = vmatpush1.msra.mxu0 0.0
    %1088 = vmatprep.subr.mxu0 0.0
    %1089 = vmatpush1.msra.mxu0 0.0
    %1090 = vmatprep.subr.mxu0 0.0
    %1091 = vmatpush1.msra.mxu0 %v188
    %1092 = vmatprep.subr.mxu0 0.0
    %1093 = vmatpush1.msra.mxu0 %v187
    %1094 = vmatprep.subr.mxu0 0.0
    %1095 = vmatpush1.msra.mxu0 %v186
    %1096 = vmatprep.subr.mxu0 0.0
    %1097 = vmatpush1.msra.mxu0 %v185
    %1098 = vmatprep.subr.mxu0 0.0
    %1099 = vmatpush2.msra.mxu0 0.0
    %1100 = vmatprep.subr.mxu0 0.0
    %1101 = vmatpush2.msra.mxu0 0.0
    %1102 = vmatprep.subr.mxu0 0.0
    %1103 = vmatpush2.msra.mxu0 0.0
    %1104 = vmatprep.subr.mxu0 0.0
    %1105 = vmatpush2.msra.mxu0 0.0
    %1106 = vmatprep.subr.mxu0 0.0
    %1107 = vmatpush2.msra.mxu0 0.0
    %1108 = vmatprep.subr.mxu0 0.0
    %1109 = vmatpush2.msra.mxu0 0.0
    %1110 = vmatprep.subr.mxu0 0.0
    %1111 = vmatpush2.msra.mxu0 0.0
    %1112 = vmatprep.subr.mxu0 0.0
    %1113 = vmatpush2.msra.mxu0 0.0
    %1114 = vmatprep.subr.mxu0 0.0
    %1115 = vmatpush2.msra.mxu0 0.0
    %1116 = vmatprep.subr.mxu0 0.0
    %1117 = vmatpush2.msra.mxu0 0.0
    %1118 = vmatprep.subr.mxu0 0.0
    %1119 = vmatpush2.msra.mxu0 0.0
    %1120 = vmatprep.subr.mxu0 0.0
    %1121 = vmatpush2.msra.mxu0 0.0
    %1122 = vmatprep.subr.mxu0 0.0
    %1123 = vmatpush2.msra.mxu0 0.0
    %1124 = vmatprep.subr.mxu0 0.0
    %1125 = vmatpush2.msra.mxu0 0.0
    %1126 = vmatprep.subr.mxu0 0.0
    %1127 = vmatpush2.msra.mxu0 0.0
    %1128 = vmatprep.subr.mxu0 0.0
    %1129 = vmatpush2.msra.mxu0 0.0
    %1130 = vmatprep.mubr.f32.mxu0 0.0
    %1131 = vmatmul.mubr.f32.gmra.mxu0 %v1064
    %v1132 = vpop.f32.mrf.mxu0
    %v1133 = vadd.f32 0.0, %v1132
    %v1134 = vpop.f32.mrf.mxu0
    %1135 = vdwg.mxu0
    %v1136 = vadd.f32 %v174, %v1133
    %v1137 = vxor.u32 %v1136, 2147483648
    %v1138 = vmul.f32 %v1137, 1.442695
    %v1139 = vpow.pop %v1138
    %v1140 = vadd.f32 %v1139, 1.0
    %v1141 = vrcp.pop %v1140
    %v1142 = vmul.f32 1.0, %v1141
    %v1143 = vadd.f32 %v1133, %v278
    %v1146 = vunpack.c.l.s4 1983009808
    %v1147 = vunpack.c.0.s8 %v1146
    %v1148 = vlaneseq
    %v1149 = vshrl.u32 %v1148, 7
    %v1150 = vsub.s32 %v1147, %v1149
    %v1151 = vrot.slane %v1143, %v1150
    %1152 = vrot.lane.b32.xlu0 %v1151, 64
    %v1153 = vpop.permute.xlu0 %1152
    %v1155 = vmul.f32 %v1142, %v1153
    %1157 = vrot.lane.b32.xlu0 %v1155, 64
    %v1158 = vpop.permute.xlu0 %1157
    %v1160 = vadd.f32 %v174, %v1158
    %v1161 = vtanh.pop %v1160
    %v1164 = vunpack.c.l.s4 1983009808
    %v1165 = vunpack.c.0.s8 %v1164
    %v1166 = vlaneseq
    %v1167 = vshrl.u32 %v1166, 7
    %v1168 = vsub.s32 %v1165, %v1167
    %v1169 = vrot.slane %v1161, %v1168
    %1170 = vrot.lane.b32.xlu0 %v1169, 64
    %v1171 = vpop.permute.xlu0 %1170
    %v1173 = vsub.f32 %v1061, %v1171
    %v1176 = vunpack.c.l.s4 1983009808
    %v1177 = vunpack.c.0.s8 %v1176
    %v1178 = vlaneseq
    %v1179 = vshrl.u32 %v1178, 7
    %v1180 = vsub.s32 %v1177, %v1179
    %v1181 = vrot.slane %v1173, %v1180
    %1182 = vrot.lane.b32.xlu0 %v1181, 32
    %v1183 = vpop.permute.xlu0 %1182
    %v1185 = vmul.f32 %v1142, %v1183
    %1187 = vrot.lane.b32.xlu0 %v1185, 32
    %v1188 = vpop.permute.xlu0 %1187
    %v1190 = vadd.f32 %v1161, %v1188
    %vm1191 = vcmp.gt.s32.totalorder %v190, 6
    %v1192 = vsel %vm1191, 1, 0
    %1193 = vset.pattern.permute.xlu0 0
    %1194 = vperm.xlu0 %1193, %v1192
    %v1195 = vpop.permute.xlu0 %1194
    %vm1196 = vcmp.eq.s32.totalorder %v1195, 1
    %v1199 = vunpack.c.l.s4 1983009808
    %v1200 = vunpack.c.0.s8 %v1199
    %v1201 = vlaneseq
    %v1202 = vshrl.u32 %v1201, 7
    %v1203 = vsub.s32 %v1200, %v1202
    %v1204 = vrot.slane %v1190, %v1203
    %1205 = vrot.lane.b32.xlu0 %v1204, 64
    %v1206 = vpop.permute.xlu0 %1205
    %v1208 = vsel %vm1196, %v1206, %v1061
    %v1209 = vsel %vm1196, %v1206, 0.0
    %v1211 = vsel %vm191, %v1208, 0
    %1213 = vmatprep.subr.mxu0 0.0
    %1214 = vmatpush1.msra.mxu0 0.0
    %1215 = vmatprep.subr.mxu0 0.0
    %1216 = vmatpush1.msra.mxu0 0.0
    %1217 = vmatprep.subr.mxu0 0.0
    %1218 = vmatpush1.msra.mxu0 0.0
    %1219 = vmatprep.subr.mxu0 0.0
    %1220 = vmatpush1.msra.mxu0 0.0
    %1221 = vmatprep.subr.mxu0 0.0
    %1222 = vmatpush1.msra.mxu0 0.0
    %1223 = vmatprep.subr.mxu0 0.0
    %1224 = vmatpush1.msra.mxu0 0.0
    %1225 = vmatprep.subr.mxu0 0.0
    %1226 = vmatpush1.msra.mxu0 0.0
    %1227 = vmatprep.subr.mxu0 0.0
    %1228 = vmatpush1.msra.mxu0 0.0
    %1229 = vmatprep.subr.mxu0 0.0
    %1230 = vmatpush1.msra.mxu0 0.0
    %1231 = vmatprep.subr.mxu0 0.0
    %1232 = vmatpush1.msra.mxu0 0.0
    %1233 = vmatprep.subr.mxu0 0.0
    %1234 = vmatpush1.msra.mxu0 0.0
    %1235 = vmatprep.subr.mxu0 0.0
    %1236 = vmatpush1.msra.mxu0 0.0
    %1237 = vmatprep.subr.mxu0 0.0
    %1238 = vmatpush1.msra.mxu0 %v188
    %1239 = vmatprep.subr.mxu0 0.0
    %1240 = vmatpush1.msra.mxu0 %v187
    %1241 = vmatprep.subr.mxu0 0.0
    %1242 = vmatpush1.msra.mxu0 %v186
    %1243 = vmatprep.subr.mxu0 0.0
    %1244 = vmatpush1.msra.mxu0 %v185
    %1245 = vmatprep.subr.mxu0 0.0
    %1246 = vmatpush2.msra.mxu0 0.0
    %1247 = vmatprep.subr.mxu0 0.0
    %1248 = vmatpush2.msra.mxu0 0.0
    %1249 = vmatprep.subr.mxu0 0.0
    %1250 = vmatpush2.msra.mxu0 0.0
    %1251 = vmatprep.subr.mxu0 0.0
    %1252 = vmatpush2.msra.mxu0 0.0
    %1253 = vmatprep.subr.mxu0 0.0
    %1254 = vmatpush2.msra.mxu0 0.0
    %1255 = vmatprep.subr.mxu0 0.0
    %1256 = vmatpush2.msra.mxu0 0.0
    %1257 = vmatprep.subr.mxu0 0.0
    %1258 = vmatpush2.msra.mxu0 0.0
    %1259 = vmatprep.subr.mxu0 0.0
    %1260 = vmatpush2.msra.mxu0 0.0
    %1261 = vmatprep.subr.mxu0 0.0
    %1262 = vmatpush2.msra.mxu0 0.0
    %1263 = vmatprep.subr.mxu0 0.0
    %1264 = vmatpush2.msra.mxu0 0.0
    %1265 = vmatprep.subr.mxu0 0.0
    %1266 = vmatpush2.msra.mxu0 0.0
    %1267 = vmatprep.subr.mxu0 0.0
    %1268 = vmatpush2.msra.mxu0 0.0
    %1269 = vmatprep.subr.mxu0 0.0
    %1270 = vmatpush2.msra.mxu0 0.0
    %1271 = vmatprep.subr.mxu0 0.0
    %1272 = vmatpush2.msra.mxu0 0.0
    %1273 = vmatprep.subr.mxu0 0.0
    %1274 = vmatpush2.msra.mxu0 0.0
    %1275 = vmatprep.subr.mxu0 0.0
    %1276 = vmatpush2.msra.mxu0 0.0
    %1277 = vmatprep.mubr.f32.mxu0 0.0
    %1278 = vmatmul.mubr.f32.gmra.mxu0 %v1211
    %v1279 = vpop.f32.mrf.mxu0
    %v1280 = vadd.f32 0.0, %v1279
    %v1281 = vpop.f32.mrf.mxu0
    %1282 = vdwg.mxu0
    %v1283 = vadd.f32 %v176, %v1280
    %v1284 = vxor.u32 %v1283, 2147483648
    %v1285 = vmul.f32 %v1284, 1.442695
    %v1286 = vpow.pop %v1285
    %v1287 = vadd.f32 %v1286, 1.0
    %v1288 = vrcp.pop %v1287
    %v1289 = vmul.f32 1.0, %v1288
    %v1290 = vadd.f32 %v1280, %v278
    %v1293 = vunpack.c.l.s4 1983009808
    %v1294 = vunpack.c.0.s8 %v1293
    %v1295 = vlaneseq
    %v1296 = vshrl.u32 %v1295, 7
    %v1297 = vsub.s32 %v1294, %v1296
    %v1298 = vrot.slane %v1290, %v1297
    %1299 = vrot.lane.b32.xlu0 %v1298, 64
    %v1300 = vpop.permute.xlu0 %1299
    %v1302 = vmul.f32 %v1289, %v1300
    %1304 = vrot.lane.b32.xlu0 %v1302, 64
    %v1305 = vpop.permute.xlu0 %1304
    %v1307 = vadd.f32 %v176, %v1305
    %v1308 = vtanh.pop %v1307
    %v1311 = vunpack.c.l.s4 1983009808
    %v1312 = vunpack.c.0.s8 %v1311
    %v1313 = vlaneseq
    %v1314 = vshrl.u32 %v1313, 7
    %v1315 = vsub.s32 %v1312, %v1314
    %v1316 = vrot.slane %v1308, %v1315
    %1317 = vrot.lane.b32.xlu0 %v1316, 64
    %v1318 = vpop.permute.xlu0 %1317
    %v1320 = vsub.f32 %v1208, %v1318
    %v1323 = vunpack.c.l.s4 1983009808
    %v1324 = vunpack.c.0.s8 %v1323
    %v1325 = vlaneseq
    %v1326 = vshrl.u32 %v1325, 7
    %v1327 = vsub.s32 %v1324, %v1326
    %v1328 = vrot.slane %v1320, %v1327
    %1329 = vrot.lane.b32.xlu0 %v1328, 32
    %v1330 = vpop.permute.xlu0 %1329
    %v1332 = vmul.f32 %v1289, %v1330
    %1334 = vrot.lane.b32.xlu0 %v1332, 32
    %v1335 = vpop.permute.xlu0 %1334
    %v1337 = vadd.f32 %v1308, %v1335
    %vm1338 = vcmp.gt.s32.totalorder %v190, 7
    %v1339 = vsel %vm1338, 1, 0
    %1340 = vset.pattern.permute.xlu0 0
    %1341 = vperm.xlu0 %1340, %v1339
    %v1342 = vpop.permute.xlu0 %1341
    %vm1343 = vcmp.eq.s32.totalorder %v1342, 1
    %v1346 = vunpack.c.l.s4 1983009808
    %v1347 = vunpack.c.0.s8 %v1346
    %v1348 = vlaneseq
    %v1349 = vshrl.u32 %v1348, 7
    %v1350 = vsub.s32 %v1347, %v1349
    %v1351 = vrot.slane %v1337, %v1350
    %1352 = vrot.lane.b32.xlu0 %v1351, 64
    %v1353 = vpop.permute.xlu0 %1352
    %v1355 = vsel %vm1343, %v1353, %v1208
    %v1356 = vsel %vm1343, %v1353, 0.0
    %1358 = vrot.lane.b32.xlu0 %v474, 32
    %v1359 = vpop.permute.xlu0 %1358
    %1362 = vrot.lane.b32.xlu0 %v621, 64
    %v1363 = vpop.permute.xlu0 %1362
    %1366 = vrot.lane.b32.xlu0 %v768, 96
    %v1367 = vpop.permute.xlu0 %1366
    %1370 = vrot.lane.b32.xlu0 %v1062, 32
    %v1371 = vpop.permute.xlu0 %1370
    %1374 = vrot.lane.b32.xlu0 %v1209, 64
    %v1375 = vpop.permute.xlu0 %1374
    %1378 = vrot.lane.b32.xlu0 %v1356, 96
    %v1379 = vpop.permute.xlu0 %1378
    %v1381 = vsel %vm191, %v327, %v1359
    %vm1382 = vcmask 523264
    %v1383 = vsel %vm1382, %v1381, %v1363
    %vm1384 = vcmask 785408
    %v1385 = vsel %vm1384, %v1383, %v1367
    %v1386 = vsel %vm191, %v915, %v1371
    %v1387 = vsel %vm1382, %v1386, %v1375
    %v1388 = vsel %vm1384, %v1387, %v1379
    %v1391 = vcombine.low %v1385, %v1388
    %v1393 = vunpack.c.l.s4 1983009808
    %v1394 = vunpack.c.0.s8 %v1393
    %v1395 = vlaneseq
    %v1396 = vshrl.u32 %v1395, 7
    %v1397 = vsub.s32 %v1394, %v1396
    %v1398 = vrot.slane %v1391, %v1397
    %1400 = vst [vmem:[%s5] sm:$0xf] %v1398
    %vm1401 = vcmask 254976
    %1402 = vst.msk [vmem:[#allocation5] sm:$0x3] %vm1401, %v1355
    // Predicated region
    $region26: #{encoder_forward.1} parent=1 // pred_check
      _
    $region27: #{encoder_forward.1} parent=1 // pred_check_branch
      %1404 = sbr.rel (0) target = $region29
    $region28: #{encoder_forward.1} parent=1 // pred_region
      _
    $region29: #{encoder_forward.1} parent=1 // pred_fallthru
      _
    // Predicated region
    $region30: #{encoder_forward.1} parent=1 // pred_check
      _
    $region31: #{encoder_forward.1} parent=1 // pred_check_branch
      %1406 = sbr.rel (0) target = $region33
    $region32: #{encoder_forward.1} parent=1 // pred_region
      %s1408 = ssub.s32 32, 32
      %1409 = vsyncadd [#allocation4], %s1408
      %s1411 = sshll.u32 [#allocation5], 4
      %s1412 = int_to_ptr.vmem [resolvable:$true] %s1411
      %1414 = dma.vmem_to_hbm [thread:$0]  %s1412, 32, %s6, [#allocation4]
    $region33: #{encoder_forward.1} parent=1 // pred_fallthru
      _
    // Predicated region
    $region34: #{encoder_forward.1} parent=1 // pred_check
      _
    $region35: #{encoder_forward.1} parent=1 // pred_check_branch
      %1416 = sbr.rel (0) target = $region37
    $region36: #{encoder_forward.1} parent=1 // pred_region
      _
    $region37: #{encoder_forward.1} parent=1 // pred_fallthru
      _
    // Predicated region
    $region38: #{encoder_forward.1} parent=1 // pred_check
      _
    $region39: #{encoder_forward.1} parent=1 // pred_check_branch
      %1418 = sbr.rel (0) target = $region41
    $region40: #{encoder_forward.1} parent=1 // pred_region
      %1419 = dma.done [#allocation4], 32
    $region41: #{encoder_forward.1} parent=1 // pred_fallthru
      _
    %1420 = vsyncpa [#allocation3], 1
    %1421 = vsyncpa [#allocation4], 1

</llo_original>
